<compile_context>
chip_gen: v5e
topology: v5e:2x2
jax: 0.10.0
libtpu: 0.0.40
codegen_flags: <defaults>
</compile_context>

<pallas_src>
import functools

import jax
import jax.numpy as jnp
from jax.experimental import pallas as pl
from jax.experimental.pallas import tpu as pltpu


def _round_up(x, m):
    return (x + m - 1) // m * m


def _head_kernel(x_ref, w1_ref, b1_ref, gamma_ref, beta_ref, w2_ref, b2_ref,
                 o_ref, *, eps, inv_h, tanh_gelu):
    x = x_ref[...]                                            # (TM, H) bf16

    # ---- transform.dense: x @ W1 + b1 (MXU bf16 operands, f32 accumulate) ----
    h = jnp.dot(x, w1_ref[...], preferred_element_type=jnp.float32)
    h = h + b1_ref[...]                                       # b1 is (1, H) f32

    # ---- transform.transform_act_fn ----
    if tanh_gelu:
        # tanh-approx GELU: transcendental lands on the otherwise-idle EUP
        # slot instead of a long f32 VALU erf polynomial (v6e/v7x relief).
        c = 0.7978845608028654  # sqrt(2/pi)
        h = 0.5 * h * (1.0 + jnp.tanh(c * (h + 0.044715 * h * h * h)))
    else:
        # exact-erf GELU, matching nn.GELUActivation in the PyTorch module.
        h = 0.5 * h * (1.0 + jax.lax.erf(h * 0.7071067811865476))

    # ---- transform.LayerNorm (eps=1e-12, elementwise affine) ----
    # Fused one-pass statistics: no (TM, H) centered temp before the second
    # reduction; both XLU reductions issue back-to-back.
    s1 = jnp.sum(h, axis=-1, keepdims=True)
    s2 = jnp.sum(h * h, axis=-1, keepdims=True)
    mu = s1 * inv_h
    var = s2 * inv_h - mu * mu
    inv_std = jax.lax.rsqrt(var + eps)
    hn = (h - mu) * inv_std
    hn = hn * gamma_ref[...] + beta_ref[...]

    # ---- decoder: hn @ W2_pad + b2_pad (lane-dense 128-wide output) ----
    out = jnp.dot(hn.astype(jnp.bfloat16), w2_ref[...],
                  preferred_element_type=jnp.float32)
    o_ref[...] = (out + b2_ref[...]).astype(o_ref.dtype)


def prepare_head_params(w1, b1, gamma, beta, w2, b2):
    """One-time weight prep (bf16 cast + decoder lane padding).

    Call ONCE and reuse across calls: doing this per call roughly doubles the
    weight HBM traffic, which dominates wall time in the small-M regime.
    """
    H = w1.shape[0]
    L = w2.shape[1]
    L_pad = _round_up(L, 128)
    return dict(
        w1=w1.astype(jnp.bfloat16),                                   # (H, H)
        b1=b1.reshape(1, H).astype(jnp.float32),
        gamma=gamma.reshape(1, H).astype(jnp.float32),
        beta=beta.reshape(1, H).astype(jnp.float32),
        w2=jnp.zeros((H, L_pad), jnp.bfloat16).at[:, :L].set(
            w2.astype(jnp.bfloat16)),                                 # (H, Lp)
        b2=jnp.zeros((1, L_pad), jnp.float32).at[:, :L].set(
            b2.astype(jnp.float32)),                                  # (1, Lp)
    )


@functools.partial(jax.jit,
                   static_argnames=("num_labels", "eps", "tm", "tanh_gelu"))
def text_classifier_head(x, params, *, num_labels, eps=1e-12, tm=1024,
                         tanh_gelu=False):
    """x: (M, H) float array; params: output of prepare_head_params().

    Returns (M, num_labels) float32 logits.
    """
    M, H = x.shape
    L_pad = params["w2"].shape[1]

    # bf16 x halves the pipelined input DMA; matmuls still accumulate in f32
    # and all GELU / LayerNorm math stays f32.
    x = x.astype(jnp.bfloat16)

    # Token-axis tile. TM is a multiple of 8; block shapes need not divide M
    # (grid = cdiv handles the ragged last block: OOB rows are row-independent
    # and their output stores are masked), so no wrapper-side jnp.pad of x.
    TM = _round_up(min(tm, _round_up(M, 8)), 8)
    if M > 8 and pl.cdiv(M, TM) < 2:
        # Guarantee >= 2 grid steps so both TensorCores get work on v7x under
        # dimension_semantics=("parallel",); costs nothing on 1-TC v5e/v6e.
        TM = _round_up(pl.cdiv(M, 2), 8)
    grid = (pl.cdiv(M, TM),)

    kernel = functools.partial(_head_kernel, eps=eps, inv_h=1.0 / H,
                               tanh_gelu=tanh_gelu)
    out = pl.pallas_call(
        kernel,
        out_shape=jax.ShapeDtypeStruct((M, L_pad), jnp.float32),
        grid=grid,
        in_specs=[
            pl.BlockSpec((TM, H), lambda i: (i, 0)),       # x: pipelined bf16
            pl.BlockSpec((H, H), lambda i: (0, 0)),        # W1: VMEM-resident
            pl.BlockSpec((1, H), lambda i: (0, 0)),        # b1
            pl.BlockSpec((1, H), lambda i: (0, 0)),        # gamma
            pl.BlockSpec((1, H), lambda i: (0, 0)),        # beta
            pl.BlockSpec((H, L_pad), lambda i: (0, 0)),    # W2 (lane-padded)
            pl.BlockSpec((1, L_pad), lambda i: (0, 0)),    # b2 (lane-padded)
        ],
        out_specs=pl.BlockSpec((TM, L_pad), lambda i: (i, 0)),
        # Default 32 MiB scoped VMEM is ample (~6-8 MiB footprint at TM<=1024)
        # and safe on v7x's 64 MiB physical VMEM.
        compiler_params=pltpu.CompilerParams(
            dimension_semantics=("parallel",),
        ),
    )(x, params["w1"], params["b1"], params["gamma"], params["beta"],
      params["w2"], params["b2"])

    # TODO(synk): deployed M~16 path is pure exposed weight-DMA latency; hide it
    # with a cross-call W1/W2 prefetch (P10: semaphore+VMEM-ref outputs) or by
    # fusing this head into the preceding layer's kernel.
    # TODO(synk): on MXU-bound v5e the remaining lever is int8 W1 with
    # per-channel scales, gated on an accuracy check.
    return out[:, :num_labels]


def _reference(x, w1, b1, gamma, beta, w2, b2, eps=1e-12):
    h = x @ w1 + b1
    h = 0.5 * h * (1.0 + jax.lax.erf(h / jnp.sqrt(2.0)))
    mu = jnp.mean(h, axis=-1, keepdims=True)
    var = jnp.mean((h - mu) ** 2, axis=-1, keepdims=True)
    hn = (h - mu) * jax.lax.rsqrt(var + eps)
    hn = hn * gamma + beta
    return hn @ w2 + b2


if __name__ == "__main__":
    # Module hardcodes LayerNorm((768,)) so input_dim must be 768.
    input_dim = 768
    num_labels = 4
    batch, seq = 2, 8

    key = jax.random.PRNGKey(0)
    kx, kw1, kb1, kw2, kb2 = jax.random.split(key, 5)

    # Deterministic synthetic parameters (small scale for numerical sanity).
    w1 = (jax.random.normal(kw1, (input_dim, input_dim), jnp.float32)
          * (1.0 / jnp.sqrt(input_dim)))
    b1 = jax.random.normal(kb1, (input_dim,), jnp.float32) * 0.02
    gamma = jnp.ones((input_dim,), jnp.float32)
    beta = jnp.zeros((input_dim,), jnp.float32)
    w2 = (jax.random.normal(kw2, (input_dim, num_labels), jnp.float32)
          * (1.0 / jnp.sqrt(input_dim)))
    b2 = jax.random.normal(kb2, (num_labels,), jnp.float32) * 0.02

    # Input tokens: (batch, seq, hidden) flattened to (M, H) for the kernel.
    x = jax.random.normal(kx, (batch, seq, input_dim), jnp.float32)
    x2d = x.reshape(batch * seq, input_dim)

    # One-time weight prep, reused across calls.
    params = prepare_head_params(w1, b1, gamma, beta, w2, b2)
    params = jax.block_until_ready(params)

    out = text_classifier_head(x2d, params, num_labels=num_labels)
    out = jax.block_until_ready(out)

    ref = _reference(x2d, w1, b1, gamma, beta, w2, b2)
    assert out.shape == (batch * seq, num_labels)
    # bf16 dot operands (f32 accumulate) -> relaxed tolerance vs f32 reference.
    assert jnp.allclose(out, ref, atol=5e-2, rtol=5e-2), (
        "mismatch vs reference: max abs diff = "
        f"{jnp.max(jnp.abs(out - ref))}")

    # reshape back to (batch, seq, num_labels) to mirror the PyTorch output.
    _ = out.reshape(batch, seq, num_labels)

    print("KERNEL_OK")
</pallas_src>

<mosaic_0001>
module attributes {stable_mosaic.version = 11 : i64} {
  func.func @_head_kernel(%arg0: i32, %arg1: memref<8x768xbf16, #tpu.memory_space<vmem>>, %arg2: memref<768x768xbf16, #tpu.memory_space<vmem>>, %arg3: memref<1x768xf32, #tpu.memory_space<vmem>>, %arg4: memref<1x768xf32, #tpu.memory_space<vmem>>, %arg5: memref<1x768xf32, #tpu.memory_space<vmem>>, %arg6: memref<768x128xbf16, #tpu.memory_space<vmem>>, %arg7: memref<1x128xf32, #tpu.memory_space<vmem>>, %arg8: memref<8x128xf32, #tpu.memory_space<vmem>>) attributes {dimension_semantics = [#tpu.dimension_semantics<parallel>], iteration_bounds = array<i64: 2>, scalar_prefetch = 0 : i64, scratch_operands = 0 : i64, tpu.core_type = #tpu.core_type<tc>, window_params = [{transform_indices = @transform_0, window_bounds = array<i64: 8, 768>}, {pipeline_mode = #tpu.pipeline_mode<synchronous>, transform_indices = @transform_1, window_bounds = array<i64: 768, 768>}, {pipeline_mode = #tpu.pipeline_mode<synchronous>, transform_indices = @transform_2, window_bounds = array<i64: 1, 768>}, {pipeline_mode = #tpu.pipeline_mode<synchronous>, transform_indices = @transform_3, window_bounds = array<i64: 1, 768>}, {pipeline_mode = #tpu.pipeline_mode<synchronous>, transform_indices = @transform_4, window_bounds = array<i64: 1, 768>}, {pipeline_mode = #tpu.pipeline_mode<synchronous>, transform_indices = @transform_5, window_bounds = array<i64: 768, 128>}, {pipeline_mode = #tpu.pipeline_mode<synchronous>, transform_indices = @transform_6, window_bounds = array<i64: 1, 128>}, {transform_indices = @transform_7, window_bounds = array<i64: 8, 128>}]} {
    %c0 = arith.constant 0 : index
    %c0_0 = arith.constant 0 : index
    %0 = vector.load %arg1[%c0, %c0_0] : memref<8x768xbf16, #tpu.memory_space<vmem>>, vector<8x768xbf16>
    %c0_1 = arith.constant 0 : index
    %c0_2 = arith.constant 0 : index
    %1 = vector.load %arg2[%c0_1, %c0_2] : memref<768x768xbf16, #tpu.memory_space<vmem>>, vector<768x768xbf16>
    %cst = arith.constant dense<0.000000e+00> : vector<8x768xf32>
    %2 = tpu.matmul %0, %1, %cst {dimension_numbers = #tpu.dot_dimension_numbers<[1], [0], [0], [1], [0, 0, 1, 1], [], []>} : vector<8x768xbf16>, vector<768x768xbf16>, vector<8x768xf32> -> vector<8x768xf32>
    %c0_3 = arith.constant 0 : index
    %c0_4 = arith.constant 0 : index
    %3 = vector.load %arg3[%c0_3, %c0_4] : memref<1x768xf32, #tpu.memory_space<vmem>>, vector<1x768xf32>
    %4 = vector.broadcast %3 : vector<1x768xf32> to vector<8x768xf32>
    %5 = arith.addf %2, %4 : vector<8x768xf32>
    %cst_5 = arith.constant 5.000000e-01 : f32
    %6 = vector.broadcast %cst_5 : f32 to vector<8x768xf32>
    %7 = arith.mulf %6, %5 : vector<8x768xf32>
    %cst_6 = arith.constant 0.707106769 : f32
    %8 = vector.broadcast %cst_6 : f32 to vector<8x768xf32>
    %9 = arith.mulf %5, %8 : vector<8x768xf32>
    %10 = math.erf %9 : vector<8x768xf32>
    %cst_7 = arith.constant 1.000000e+00 : f32
    %11 = vector.broadcast %cst_7 : f32 to vector<8x768xf32>
    %12 = arith.addf %11, %10 : vector<8x768xf32>
    %13 = arith.mulf %7, %12 : vector<8x768xf32>
    %cst_8 = arith.constant dense<0.000000e+00> : vector<8xf32>
    %14 = vector.multi_reduction <add>, %13, %cst_8 [1] : vector<8x768xf32> to vector<8xf32>
    %15 = vector.shape_cast %14 : vector<8xf32> to vector<8x1xf32>
    %16 = arith.mulf %13, %13 : vector<8x768xf32>
    %cst_9 = arith.constant dense<0.000000e+00> : vector<8xf32>
    %17 = vector.multi_reduction <add>, %16, %cst_9 [1] : vector<8x768xf32> to vector<8xf32>
    %18 = vector.shape_cast %17 : vector<8xf32> to vector<8x1xf32>
    %cst_10 = arith.constant 0.00130208337 : f32
    %19 = vector.broadcast %cst_10 : f32 to vector<8x1xf32>
    %20 = arith.mulf %15, %19 : vector<8x1xf32>
    %cst_11 = arith.constant 0.00130208337 : f32
    %21 = vector.broadcast %cst_11 : f32 to vector<8x1xf32>
    %22 = arith.mulf %18, %21 : vector<8x1xf32>
    %23 = arith.mulf %20, %20 : vector<8x1xf32>
    %24 = arith.subf %22, %23 : vector<8x1xf32>
    %cst_12 = arith.constant 9.99999996E-13 : f32
    %25 = vector.broadcast %cst_12 : f32 to vector<8x1xf32>
    %26 = arith.addf %24, %25 : vector<8x1xf32>
    %27 = math.rsqrt %26 : vector<8x1xf32>
    %28 = vector.broadcast %20 : vector<8x1xf32> to vector<8x768xf32>
    %29 = arith.subf %13, %28 : vector<8x768xf32>
    %30 = vector.broadcast %27 : vector<8x1xf32> to vector<8x768xf32>
    %31 = arith.mulf %29, %30 : vector<8x768xf32>
    %c0_13 = arith.constant 0 : index
    %c0_14 = arith.constant 0 : index
    %32 = vector.load %arg4[%c0_13, %c0_14] : memref<1x768xf32, #tpu.memory_space<vmem>>, vector<1x768xf32>
    %33 = vector.broadcast %32 : vector<1x768xf32> to vector<8x768xf32>
    %34 = arith.mulf %31, %33 : vector<8x768xf32>
    %c0_15 = arith.constant 0 : index
    %c0_16 = arith.constant 0 : index
    %35 = vector.load %arg5[%c0_15, %c0_16] : memref<1x768xf32, #tpu.memory_space<vmem>>, vector<1x768xf32>
    %36 = vector.broadcast %35 : vector<1x768xf32> to vector<8x768xf32>
    %37 = arith.addf %34, %36 : vector<8x768xf32>
    %38 = arith.truncf %37 : vector<8x768xf32> to vector<8x768xbf16>
    %c0_17 = arith.constant 0 : index
    %c0_18 = arith.constant 0 : index
    %39 = vector.load %arg6[%c0_17, %c0_18] : memref<768x128xbf16, #tpu.memory_space<vmem>>, vector<768x128xbf16>
    %cst_19 = arith.constant dense<0.000000e+00> : vector<8x128xf32>
    %40 = tpu.matmul %38, %39, %cst_19 {dimension_numbers = #tpu.dot_dimension_numbers<[1], [0], [0], [1], [0, 0, 1, 1], [], []>} : vector<8x768xbf16>, vector<768x128xbf16>, vector<8x128xf32> -> vector<8x128xf32>
    %c0_20 = arith.constant 0 : index
    %c0_21 = arith.constant 0 : index
    %41 = vector.load %arg7[%c0_20, %c0_21] : memref<1x128xf32, #tpu.memory_space<vmem>>, vector<1x128xf32>
    %42 = vector.broadcast %41 : vector<1x128xf32> to vector<8x128xf32>
    %43 = arith.addf %40, %42 : vector<8x128xf32>
    %c0_22 = arith.constant 0 : index
    %c0_23 = arith.constant 0 : index
    %44 = vector.load %arg8[%c0_22, %c0_23] : memref<8x128xf32, #tpu.memory_space<vmem>>, vector<8x128xf32>
    tpu.vector_store %arg8[%c0_22, %c0_23], %43 {strides = array<i32>} : memref<8x128xf32, #tpu.memory_space<vmem>>, vector<8x128xf32>,
    return
  }
  func.func @transform_0(%arg0: i32) -> (i32, i32) {
    %c0_i32 = arith.constant 0 : i32
    %c0_i32_0 = arith.constant 0 : i32
    return %arg0, %c0_i32 : i32, i32
  }
  func.func @transform_1(%arg0: i32) -> (i32, i32) {
    %c0_i32 = arith.constant 0 : i32
    %c0_i32_0 = arith.constant 0 : i32
    %c0_i32_1 = arith.constant 0 : i32
    return %c0_i32, %c0_i32_0 : i32, i32
  }
  func.func @transform_2(%arg0: i32) -> (i32, i32) {
    %c0_i32 = arith.constant 0 : i32
    %c0_i32_0 = arith.constant 0 : i32
    %c0_i32_1 = arith.constant 0 : i32
    return %c0_i32, %c0_i32_0 : i32, i32
  }
  func.func @transform_3(%arg0: i32) -> (i32, i32) {
    %c0_i32 = arith.constant 0 : i32
    %c0_i32_0 = arith.constant 0 : i32
    %c0_i32_1 = arith.constant 0 : i32
    return %c0_i32, %c0_i32_0 : i32, i32
  }
  func.func @transform_4(%arg0: i32) -> (i32, i32) {
    %c0_i32 = arith.constant 0 : i32
    %c0_i32_0 = arith.constant 0 : i32
    %c0_i32_1 = arith.constant 0 : i32
    return %c0_i32, %c0_i32_0 : i32, i32
  }
  func.func @transform_5(%arg0: i32) -> (i32, i32) {
    %c0_i32 = arith.constant 0 : i32
    %c0_i32_0 = arith.constant 0 : i32
    %c0_i32_1 = arith.constant 0 : i32
    return %c0_i32, %c0_i32_0 : i32, i32
  }
  func.func @transform_6(%arg0: i32) -> (i32, i32) {
    %c0_i32 = arith.constant 0 : i32
    %c0_i32_0 = arith.constant 0 : i32
    %c0_i32_1 = arith.constant 0 : i32
    return %c0_i32, %c0_i32_0 : i32, i32
  }
  func.func @transform_7(%arg0: i32) -> (i32, i32) {
    %c0_i32 = arith.constant 0 : i32
    %c0_i32_0 = arith.constant 0 : i32
    return %arg0, %c0_i32 : i32, i32
  }
}

</mosaic_0001>

<llo_original>
// kernel: text_classifier_head.1
$region0: #{text_classifier_head.1}
  #allocation0 [shape = 'u32[]', space=smem, size = 0x4, offset = 0x4, fixed_abs, tag = 'smem constant byte address 0x4 - core index']
  #allocation1 [shape = 'u32[72,128]{1,0:T(1,128)}', space=vmem, size = 0x9000, scoped, tag = 'internal scratch']
  %s0 = inlined_call_operand.vmem [shape: bf16[16,768], index: 0, kind: input, shape index: {}]
  %s1 = inlined_call_operand.hbm [shape: bf16[768,768], index: 1, kind: input, shape index: {}]
  %s2 = inlined_call_operand.hbm [shape: f32[1,768], index: 2, kind: input, shape index: {}]
  %s3 = inlined_call_operand.hbm [shape: f32[1,768], index: 3, kind: input, shape index: {}]
  %s4 = inlined_call_operand.hbm [shape: f32[1,768], index: 4, kind: input, shape index: {}]
  %s5 = inlined_call_operand.hbm [shape: bf16[768,128], index: 5, kind: input, shape index: {}]
  %s6 = inlined_call_operand.hbm [shape: f32[1,128], index: 6, kind: input, shape index: {}]
  %s7 = inlined_call_operand.vmem [shape: f32[16,128], index: 7, kind: output, shape index: {}]
  %s8 = sld [smem:[#allocation0]]
  $region85: #{text_classifier_head.1} parent=0
    _
  %s10 = ssub.s32 1, %s8
  %s11 = scalar_select 0, %s10, %s8
  $region1: #{text_classifier_head.1} parent=0
    #allocation2 [shape = 'u8[1179648]{0}', space=vmem, size = 0x120000, scoped, tag = 'input window, operand 1, single buffered']
    #allocation3 [shape = 's32[2]{0}', space=sflag, size = 0x8, scoped, tag = 'scoped memory for text_classifier_head.1']
    #allocation4 [shape = 'u8[3072]{0}', space=vmem, size = 0xc00, scoped, tag = 'input window, operand 2, single buffered']
    #allocation5 [shape = 's32[1]{0}', space=sflag, size = 0x4, scoped, tag = 'scoped memory for text_classifier_head.1']
    #allocation6 [shape = 'u8[3072]{0}', space=vmem, size = 0xc00, scoped, tag = 'input window, operand 3, single buffered']
    #allocation7 [shape = 'u8[3072]{0}', space=vmem, size = 0xc00, scoped, tag = 'input window, operand 4, single buffered']
    #allocation8 [shape = 's32[1]{0}', space=sflag, size = 0x4, scoped, tag = 'scoped memory for text_classifier_head.1']
    #allocation9 [shape = 'u8[196608]{0}', space=vmem, size = 0x30000, scoped, tag = 'input window, operand 5, single buffered']
    #allocation10 [shape = 'u8[512]{0}', space=vmem, size = 0x400, scoped, tag = 'input window, operand 6, single buffered']
    #allocation11 [shape = 's32[1]{0}', space=sflag, size = 0x4, scoped, tag = 'scoped memory for text_classifier_head.1']
    %12 = vsyncpa [#allocation3], 0
    %13 = vsyncpa [#allocation5], 0
    %14 = vsyncpa [#allocation8], 0
    %15 = vsyncpa [#allocation11], 0
    loop: start=0, step=1, limit=4
    $region2: #{text_classifier_head.1} parent=1 // loop_pre_header
      _
    $region3: #{text_classifier_head.1} parent=1 // loop_header
      %s17 = sphi 0, %s21
      %p18 = scmp.ge.s32.totalorder %s17, 4
      %s27 = sphi 0, %s29
      %s30 = sphi 0, %s27
      %s31 = sphi 0, %s30
      %s47 = sphi 0, %s31
      %s51 = sphi 0, %s51
      %s53 = sphi 0, %s51
      %s54 = sphi 0, %s53
      %s68 = sphi 0, %s54
      %s72 = sphi 0, %s72
      %s74 = sphi 0, %s72
      %s75 = sphi 0, %s74
      %s89 = sphi 0, %s75
      %s93 = sphi 0, %s93
      %s95 = sphi 0, %s93
      %s96 = sphi 0, %s95
      %s110 = sphi 0, %s96
      %s114 = sphi 0, %s114
      %s116 = sphi 0, %s114
      %s117 = sphi 0, %s116
      %s131 = sphi 0, %s117
      %s135 = sphi 0, %s135
      %s137 = sphi 0, %s135
      %s138 = sphi 0, %s137
      %s152 = sphi 0, %s138
      %s156 = sphi 0, %s156
      %s158 = sphi 0, %s156
      %s159 = sphi 0, %s158
      %s173 = sphi 0, %s159
      %s179 = sphi 0, %s181
      %s182 = sphi 0, %s179
      %s183 = sphi 0, %s182
      %s199 = sphi 0, %s183
    $region4: #{text_classifier_head.1} parent=1 // loop_header_branch
      %20 = sbr.rel (%p18) target = $region8
    $region5: #{text_classifier_head.1} parent=1 // loop_body
      %s22 = ssub.s32 %s17, 1
      %s23 = ssub.s32 %s17, 2
      %s24 = sadd.s32 %s17, 1
      %s25 = ssub.s32 %s17, %s24
      %p26 = scmp.eq.s32.totalorder %s25, 0
      %s28 = sadd.s32 %s27, 1
      %s29 = scalar_select %p26, %s27, %s28
      %p32 = pneg %p26
      %p33 = scmp.eq.s32.totalorder %s17, 1
      %p34 = por %p32, %p33
      %p35 = scmp.ne.s32.totalorder %s27, %s30
      %p36 = scmp.eq.s32.totalorder %s17, 0
      %p37 = por %p35, %p36
      %p38 = scmp.ne.s32.totalorder %s27, %s30
      %p39 = scmp.eq.s32.totalorder %s22, 1
      %p40 = por %p38, %p39
      %p41 = scmp.ne.s32.totalorder %s30, %s31
      %p42 = scmp.eq.s32.totalorder %s22, 0
      %p43 = por %p41, %p42
      %p44 = scmp.ne.s32.totalorder %s30, %s31
      %p45 = scmp.eq.s32.totalorder %s23, 1
      %p46 = por %p44, %p45
      %p48 = scmp.ne.s32.totalorder %s31, %s47
      %p49 = scmp.eq.s32.totalorder %s23, 0
      %p50 = por %p48, %p49
      %s52 = sadd.s32 %s51, 1
      %p55 = scmp.eq.s32.totalorder %s17, 1
      %p56 = scmp.ne.s32.totalorder %s51, %s53
      %p57 = scmp.eq.s32.totalorder %s17, 0
      %p58 = por %p56, %p57
      %p59 = scmp.ne.s32.totalorder %s51, %s53
      %p60 = scmp.eq.s32.totalorder %s22, 1
      %p61 = por %p59, %p60
      %p62 = scmp.ne.s32.totalorder %s53, %s54
      %p63 = scmp.eq.s32.totalorder %s22, 0
      %p64 = por %p62, %p63
      %p65 = scmp.ne.s32.totalorder %s53, %s54
      %p66 = scmp.eq.s32.totalorder %s23, 1
      %p67 = por %p65, %p66
      %p69 = scmp.ne.s32.totalorder %s54, %s68
      %p70 = scmp.eq.s32.totalorder %s23, 0
      %p71 = por %p69, %p70
      %s73 = sadd.s32 %s72, 1
      %p76 = scmp.eq.s32.totalorder %s17, 1
      %p77 = scmp.ne.s32.totalorder %s72, %s74
      %p78 = scmp.eq.s32.totalorder %s17, 0
      %p79 = por %p77, %p78
      %p80 = scmp.ne.s32.totalorder %s72, %s74
      %p81 = scmp.eq.s32.totalorder %s22, 1
      %p82 = por %p80, %p81
      %p83 = scmp.ne.s32.totalorder %s74, %s75
      %p84 = scmp.eq.s32.totalorder %s22, 0
      %p85 = por %p83, %p84
      %p86 = scmp.ne.s32.totalorder %s74, %s75
      %p87 = scmp.eq.s32.totalorder %s23, 1
      %p88 = por %p86, %p87
      %p90 = scmp.ne.s32.totalorder %s75, %s89
      %p91 = scmp.eq.s32.totalorder %s23, 0
      %p92 = por %p90, %p91
      %s94 = sadd.s32 %s93, 1
      %p97 = scmp.eq.s32.totalorder %s17, 1
      %p98 = scmp.ne.s32.totalorder %s93, %s95
      %p99 = scmp.eq.s32.totalorder %s17, 0
      %p100 = por %p98, %p99
      %p101 = scmp.ne.s32.totalorder %s93, %s95
      %p102 = scmp.eq.s32.totalorder %s22, 1
      %p103 = por %p101, %p102
      %p104 = scmp.ne.s32.totalorder %s95, %s96
      %p105 = scmp.eq.s32.totalorder %s22, 0
      %p106 = por %p104, %p105
      %p107 = scmp.ne.s32.totalorder %s95, %s96
      %p108 = scmp.eq.s32.totalorder %s23, 1
      %p109 = por %p107, %p108
      %p111 = scmp.ne.s32.totalorder %s96, %s110
      %p112 = scmp.eq.s32.totalorder %s23, 0
      %p113 = por %p111, %p112
      %s115 = sadd.s32 %s114, 1
      %p118 = scmp.eq.s32.totalorder %s17, 1
      %p119 = scmp.ne.s32.totalorder %s114, %s116
      %p120 = scmp.eq.s32.totalorder %s17, 0
      %p121 = por %p119, %p120
      %p122 = scmp.ne.s32.totalorder %s114, %s116
      %p123 = scmp.eq.s32.totalorder %s22, 1
      %p124 = por %p122, %p123
      %p125 = scmp.ne.s32.totalorder %s116, %s117
      %p126 = scmp.eq.s32.totalorder %s22, 0
      %p127 = por %p125, %p126
      %p128 = scmp.ne.s32.totalorder %s116, %s117
      %p129 = scmp.eq.s32.totalorder %s23, 1
      %p130 = por %p128, %p129
      %p132 = scmp.ne.s32.totalorder %s117, %s131
      %p133 = scmp.eq.s32.totalorder %s23, 0
      %p134 = por %p132, %p133
      %s136 = sadd.s32 %s135, 1
      %p139 = scmp.eq.s32.totalorder %s17, 1
      %p140 = scmp.ne.s32.totalorder %s135, %s137
      %p141 = scmp.eq.s32.totalorder %s17, 0
      %p142 = por %p140, %p141
      %p143 = scmp.ne.s32.totalorder %s135, %s137
      %p144 = scmp.eq.s32.totalorder %s22, 1
      %p145 = por %p143, %p144
      %p146 = scmp.ne.s32.totalorder %s137, %s138
      %p147 = scmp.eq.s32.totalorder %s22, 0
      %p148 = por %p146, %p147
      %p149 = scmp.ne.s32.totalorder %s137, %s138
      %p150 = scmp.eq.s32.totalorder %s23, 1
      %p151 = por %p149, %p150
      %p153 = scmp.ne.s32.totalorder %s138, %s152
      %p154 = scmp.eq.s32.totalorder %s23, 0
      %p155 = por %p153, %p154
      %s157 = sadd.s32 %s156, 1
      %p160 = scmp.eq.s32.totalorder %s17, 1
      %p161 = scmp.ne.s32.totalorder %s156, %s158
      %p162 = scmp.eq.s32.totalorder %s17, 0
      %p163 = por %p161, %p162
      %p164 = scmp.ne.s32.totalorder %s156, %s158
      %p165 = scmp.eq.s32.totalorder %s22, 1
      %p166 = por %p164, %p165
      %p167 = scmp.ne.s32.totalorder %s158, %s159
      %p168 = scmp.eq.s32.totalorder %s22, 0
      %p169 = por %p167, %p168
      %p170 = scmp.ne.s32.totalorder %s158, %s159
      %p171 = scmp.eq.s32.totalorder %s23, 1
      %p172 = por %p170, %p171
      %p174 = scmp.ne.s32.totalorder %s159, %s173
      %p175 = scmp.eq.s32.totalorder %s23, 0
      %p176 = por %p174, %p175
      %s177 = ssub.s32 %s17, %s24
      %p178 = scmp.eq.s32.totalorder %s177, 0
      %s180 = sadd.s32 %s179, 1
      %s181 = scalar_select %p178, %s179, %s180
      %p184 = pneg %p178
      %p185 = scmp.eq.s32.totalorder %s17, 1
      %p186 = por %p184, %p185
      %p187 = scmp.ne.s32.totalorder %s179, %s182
      %p188 = scmp.eq.s32.totalorder %s17, 0
      %p189 = por %p187, %p188
      %p190 = scmp.ne.s32.totalorder %s179, %s182
      %p191 = scmp.eq.s32.totalorder %s22, 1
      %p192 = por %p190, %p191
      %p193 = scmp.ne.s32.totalorder %s182, %s183
      %p194 = scmp.eq.s32.totalorder %s22, 0
      %p195 = por %p193, %p194
      %p196 = scmp.ne.s32.totalorder %s182, %s183
      %p197 = scmp.eq.s32.totalorder %s23, 1
      %p198 = por %p196, %p197
      %p200 = scmp.ne.s32.totalorder %s183, %s199
      %p201 = scmp.eq.s32.totalorder %s23, 0
      %p202 = por %p200, %p201
      %p203 = scmp.le.s32.totalorder 1, %s17
      %p204 = scmp.lt.s32.totalorder %s17, 3
      %p205 = pnand %p203, %p204
      %p206 = pneg %p205
      // Predicated region
      $region9: #{text_classifier_head.1} parent=5 // pred_check
        _
      $region10: #{text_classifier_head.1} parent=5 // pred_check_branch
        %208 = sbr.rel (%p205) target = $region12
      $region11: #{text_classifier_head.1} parent=5 // pred_region
        %s209 = ssub.s32 %s17, 1
        // Predicated region
        $region13: #{text_classifier_head.1} parent=11 // pred_check
          %p210 = pneg %p64
        $region14: #{text_classifier_head.1} parent=11 // pred_check_branch
          %212 = sbr.rel (%p210) target = $region16
        $region15: #{text_classifier_head.1} parent=11 // pred_region
          %214 = vsyncadd [#allocation3], 0
          %s215 = sshll.u32 %s1, 4
          %s216 = int_to_ptr.hbm [resolvable:$true] %s215
          %s217 = sshll.u32 [#allocation2], 4
          %s218 = int_to_ptr.vmem [resolvable:$true] %s217
          %223 = dma.hbm_to_vmem [thread:$0]  %s216, 36864, %s218, [#allocation3], 384, 384, 24
        $region16: #{text_classifier_head.1} parent=11 // pred_fallthru
          _
        // Predicated region
        $region17: #{text_classifier_head.1} parent=11 // pred_check
          %p224 = pneg %p85
        $region18: #{text_classifier_head.1} parent=11 // pred_check_branch
          %226 = sbr.rel (%p224) target = $region20
        $region19: #{text_classifier_head.1} parent=11 // pred_region
          %228 = vsyncadd [#allocation5], 0
          %s230 = sshll.u32 %s2, 4
          %s231 = int_to_ptr.hbm [resolvable:$true] %s230
          %s232 = sshll.u32 [#allocation4], 4
          %s233 = int_to_ptr.vmem [resolvable:$true] %s232
          %235 = dma.hbm_to_vmem [thread:$0]  %s231, 96, %s233, [#allocation5]
        $region20: #{text_classifier_head.1} parent=11 // pred_fallthru
          _
        // Predicated region
        $region21: #{text_classifier_head.1} parent=11 // pred_check
          %p236 = pneg %p106
        $region22: #{text_classifier_head.1} parent=11 // pred_check_branch
          %238 = sbr.rel (%p236) target = $region24
        $region23: #{text_classifier_head.1} parent=11 // pred_region
          %240 = vsyncadd [#allocation5], 0
          %s242 = sshll.u32 %s3, 4
          %s243 = int_to_ptr.hbm [resolvable:$true] %s242
          %s244 = sshll.u32 [#allocation6], 4
          %s245 = int_to_ptr.vmem [resolvable:$true] %s244
          %247 = dma.hbm_to_vmem [thread:$0]  %s243, 96, %s245, [#allocation5]
        $region24: #{text_classifier_head.1} parent=11 // pred_fallthru
          _
        // Predicated region
        $region25: #{text_classifier_head.1} parent=11 // pred_check
          %p248 = pneg %p127
        $region26: #{text_classifier_head.1} parent=11 // pred_check_branch
          %250 = sbr.rel (%p248) target = $region28
        $region27: #{text_classifier_head.1} parent=11 // pred_region
          %252 = vsyncadd [#allocation8], 0
          %s254 = sshll.u32 %s4, 4
          %s255 = int_to_ptr.hbm [resolvable:$true] %s254
          %s256 = sshll.u32 [#allocation7], 4
          %s257 = int_to_ptr.vmem [resolvable:$true] %s256
          %259 = dma.hbm_to_vmem [thread:$0]  %s255, 96, %s257, [#allocation8]
        $region28: #{text_classifier_head.1} parent=11 // pred_fallthru
          _
        // Predicated region
        $region29: #{text_classifier_head.1} parent=11 // pred_check
          %p260 = pneg %p148
        $region30: #{text_classifier_head.1} parent=11 // pred_check_branch
          %262 = sbr.rel (%p260) target = $region32
        $region31: #{text_classifier_head.1} parent=11 // pred_region
          %264 = vsyncadd [#allocation8], 0
          %s265 = sshll.u32 %s5, 4
          %s266 = int_to_ptr.hbm [resolvable:$true] %s265
          %s267 = sshll.u32 [#allocation9], 4
          %s268 = int_to_ptr.vmem [resolvable:$true] %s267
          %273 = dma.hbm_to_vmem [thread:$0]  %s266, 6144, %s268, [#allocation8], 64, 64, 4
        $region32: #{text_classifier_head.1} parent=11 // pred_fallthru
          _
        // Predicated region
        $region33: #{text_classifier_head.1} parent=11 // pred_check
          %p274 = pneg %p169
        $region34: #{text_classifier_head.1} parent=11 // pred_check_branch
          %276 = sbr.rel (%p274) target = $region36
        $region35: #{text_classifier_head.1} parent=11 // pred_region
          %278 = vsyncadd [#allocation11], 0
          %s280 = sshll.u32 %s6, 4
          %s281 = int_to_ptr.hbm [resolvable:$true] %s280
          %s282 = sshll.u32 [#allocation10], 4
          %s283 = int_to_ptr.vmem [resolvable:$true] %s282
          %285 = dma.hbm_to_vmem [thread:$0]  %s281, 16, %s283, [#allocation11]
        $region36: #{text_classifier_head.1} parent=11 // pred_fallthru
          _
      $region12: #{text_classifier_head.1} parent=5 // pred_fallthru
        _
      %p286 = scmp.lt.s32.totalorder %s17, 2
      // Predicated region
      $region37: #{text_classifier_head.1} parent=5 // pred_check
        %p287 = pneg %p286
      $region38: #{text_classifier_head.1} parent=5 // pred_check_branch
        %289 = sbr.rel (%p287) target = $region40
      $region39: #{text_classifier_head.1} parent=5 // pred_region
        // Predicated region
        $region41: #{text_classifier_head.1} parent=39 // pred_check
          %p290 = pneg %p37
        $region42: #{text_classifier_head.1} parent=39 // pred_check_branch
          %292 = sbr.rel (%p290) target = $region44
        $region43: #{text_classifier_head.1} parent=39 // pred_region
          %p293 = scmp.lt.s32.totalorder %s17, 1
          %s294 = scalar_select %p293, %s17, 1
          %s295 = smul.addr %s294, 6
          %s296 = smul.addr %s295, 4
          %s297 = scalar_lea.vmem %s0, %s296
        $region44: #{text_classifier_head.1} parent=39 // pred_fallthru
          _
      $region40: #{text_classifier_head.1} parent=5 // pred_fallthru
        _
      %p298 = scmp.le.s32.totalorder 1, %s17
      %p299 = scmp.lt.s32.totalorder %s17, 3
      %p300 = pnand %p298, %p299
      %p301 = pneg %p300
      // Predicated region
      $region45: #{text_classifier_head.1} parent=5 // pred_check
        _
      $region46: #{text_classifier_head.1} parent=5 // pred_check_branch
        %303 = sbr.rel (%p300) target = $region48
      $region47: #{text_classifier_head.1} parent=5 // pred_region
        %s304 = ssub.s32 %s17, 1
        // Predicated region
        $region49: #{text_classifier_head.1} parent=47 // pred_check
          %p305 = pneg %p64
        $region50: #{text_classifier_head.1} parent=47 // pred_check_branch
          %307 = sbr.rel (%p305) target = $region52
        $region51: #{text_classifier_head.1} parent=47 // pred_region
          %309 = dma.done [#allocation3], 36864
        $region52: #{text_classifier_head.1} parent=47 // pred_fallthru
          _
        // Predicated region
        $region53: #{text_classifier_head.1} parent=47 // pred_check
          %p310 = pneg %p85
        $region54: #{text_classifier_head.1} parent=47 // pred_check_branch
          %312 = sbr.rel (%p310) target = $region56
        $region55: #{text_classifier_head.1} parent=47 // pred_region
          %314 = dma.done [#allocation5], 96
        $region56: #{text_classifier_head.1} parent=47 // pred_fallthru
          _
        // Predicated region
        $region57: #{text_classifier_head.1} parent=47 // pred_check
          %p315 = pneg %p106
        $region58: #{text_classifier_head.1} parent=47 // pred_check_branch
          %317 = sbr.rel (%p315) target = $region60
        $region59: #{text_classifier_head.1} parent=47 // pred_region
          %319 = dma.done [#allocation5], 96
        $region60: #{text_classifier_head.1} parent=47 // pred_fallthru
          _
        // Predicated region
        $region61: #{text_classifier_head.1} parent=47 // pred_check
          %p320 = pneg %p127
        $region62: #{text_classifier_head.1} parent=47 // pred_check_branch
          %322 = sbr.rel (%p320) target = $region64
        $region63: #{text_classifier_head.1} parent=47 // pred_region
          %324 = dma.done [#allocation8], 96
        $region64: #{text_classifier_head.1} parent=47 // pred_fallthru
          _
        // Predicated region
        $region65: #{text_classifier_head.1} parent=47 // pred_check
          %p325 = pneg %p148
        $region66: #{text_classifier_head.1} parent=47 // pred_check_branch
          %327 = sbr.rel (%p325) target = $region68
        $region67: #{text_classifier_head.1} parent=47 // pred_region
          %329 = dma.done [#allocation8], 6144
        $region68: #{text_classifier_head.1} parent=47 // pred_fallthru
          _
        // Predicated region
        $region69: #{text_classifier_head.1} parent=47 // pred_check
          %p330 = pneg %p169
        $region70: #{text_classifier_head.1} parent=47 // pred_check_branch
          %332 = sbr.rel (%p330) target = $region72
        $region71: #{text_classifier_head.1} parent=47 // pred_region
          %334 = dma.done [#allocation11], 16
        $region72: #{text_classifier_head.1} parent=47 // pred_fallthru
          _
        %p335 = scmp.lt.s32.totalorder %s22, 1
        %s336 = scalar_select %p335, %s22, 1
        %s337 = smul.addr %s336, 6
        %s338 = smul.addr %s337, 4
        %s339 = scalar_lea.vmem %s0, %s338
        %p340 = pneg %p43
        %p341 = pneg %p40
        %p342 = pneg %p64
        %p343 = pneg %p61
        %p344 = pneg %p85
        %p345 = pneg %p82
        %p346 = pneg %p106
        %p347 = pneg %p103
        %p348 = pneg %p127
        %p349 = pneg %p124
        %p350 = pneg %p148
        %p351 = pneg %p145
        %p352 = pneg %p169
        %p353 = pneg %p166
        %p354 = pneg %p195
        %p355 = pneg %p192
        %p356 = scmp.lt.s32.totalorder %s22, 1
        %s357 = scalar_select %p356, %s22, 1
        %s358 = smul.addr %s357, 8
        %s359 = scalar_lea.vmem %s7, %s358
        %p360 = scmp.lt.s32.totalorder %s22, 1
        %s361 = scalar_select %p360, %s22, 1
        %s362 = smul.addr %s361, 6
        %s363 = smul.addr %s362, 4
        %s364 = scalar_lea.vmem %s0, %s363
        %p365 = scmp.lt.s32.totalorder %s22, 1
        %s366 = scalar_select %p365, %s22, 1
        %s367 = smul.addr %s366, 8
        %s368 = scalar_lea.vmem %s7, %s367
        %v369 = vld [vmem:[%s364] sm:$0xff]
        %v370 = vld [vmem:[%s364 + $0x8] sm:$0xff]
        %v371 = vld [vmem:[%s364 + $0x10] sm:$0xff]
        %v372 = vld [vmem:[#allocation2] sm:$0xff]
        %v373 = vld [vmem:[#allocation2 + $0x8] sm:$0xff]
        %v374 = vld [vmem:[#allocation2 + $0x10] sm:$0xff]
        %v375 = vld [vmem:[#allocation2 + $0x18] sm:$0xff]
        %v376 = vld [vmem:[#allocation2 + $0x20] sm:$0xff]
        %v377 = vld [vmem:[#allocation2 + $0x28] sm:$0xff]
        %v378 = vld [vmem:[#allocation2 + $0x30] sm:$0xff]
        %v379 = vld [vmem:[#allocation2 + $0x38] sm:$0xff]
        %v380 = vld [vmem:[#allocation2 + $0x40] sm:$0xff]
        %v381 = vld [vmem:[#allocation2 + $0x48] sm:$0xff]
        %v382 = vld [vmem:[#allocation2 + $0x50] sm:$0xff]
        %v383 = vld [vmem:[#allocation2 + $0x58] sm:$0xff]
        %v384 = vld [vmem:[#allocation2 + $0x60] sm:$0xff]
        %v385 = vld [vmem:[#allocation2 + $0x68] sm:$0xff]
        %v386 = vld [vmem:[#allocation2 + $0x70] sm:$0xff]
        %v387 = vld [vmem:[#allocation2 + $0x78] sm:$0xff]
        %v388 = vld [vmem:[#allocation2 + $0x80] sm:$0xff]
        %v389 = vld [vmem:[#allocation2 + $0x88] sm:$0xff]
        %v390 = vld [vmem:[#allocation2 + $0x90] sm:$0xff]
        %v391 = vld [vmem:[#allocation2 + $0x98] sm:$0xff]
        %v392 = vld [vmem:[#allocation2 + $0xa0] sm:$0xff]
        %v393 = vld [vmem:[#allocation2 + $0xa8] sm:$0xff]
        %v394 = vld [vmem:[#allocation2 + $0xb0] sm:$0xff]
        %v395 = vld [vmem:[#allocation2 + $0xb8] sm:$0xff]
        %v396 = vld [vmem:[#allocation2 + $0xc0] sm:$0xff]
        %v397 = vld [vmem:[#allocation2 + $0xc8] sm:$0xff]
        %v398 = vld [vmem:[#allocation2 + $0xd0] sm:$0xff]
        %v399 = vld [vmem:[#allocation2 + $0xd8] sm:$0xff]
        %v400 = vld [vmem:[#allocation2 + $0xe0] sm:$0xff]
        %v401 = vld [vmem:[#allocation2 + $0xe8] sm:$0xff]
        %v402 = vld [vmem:[#allocation2 + $0xf0] sm:$0xff]
        %v403 = vld [vmem:[#allocation2 + $0xf8] sm:$0xff]
        %v404 = vld [vmem:[#allocation2 + $0x100] sm:$0xff]
        %v405 = vld [vmem:[#allocation2 + $0x108] sm:$0xff]
        %v406 = vld [vmem:[#allocation2 + $0x110] sm:$0xff]
        %v407 = vld [vmem:[#allocation2 + $0x118] sm:$0xff]
        %v408 = vld [vmem:[#allocation2 + $0x120] sm:$0xff]
        %v409 = vld [vmem:[#allocation2 + $0x128] sm:$0xff]
        %v410 = vld [vmem:[#allocation2 + $0x130] sm:$0xff]
        %v411 = vld [vmem:[#allocation2 + $0x138] sm:$0xff]
        %v412 = vld [vmem:[#allocation2 + $0x140] sm:$0xff]
        %v413 = vld [vmem:[#allocation2 + $0x148] sm:$0xff]
        %v414 = vld [vmem:[#allocation2 + $0x150] sm:$0xff]
        %v415 = vld [vmem:[#allocation2 + $0x158] sm:$0xff]
        %v416 = vld [vmem:[#allocation2 + $0x160] sm:$0xff]
        %v417 = vld [vmem:[#allocation2 + $0x168] sm:$0xff]
        %v418 = vld [vmem:[#allocation2 + $0x170] sm:$0xff]
        %v419 = vld [vmem:[#allocation2 + $0x178] sm:$0xff]
        %v420 = vld [vmem:[#allocation2 + $0x180] sm:$0xff]
        %v421 = vld [vmem:[#allocation2 + $0x188] sm:$0xff]
        %v422 = vld [vmem:[#allocation2 + $0x190] sm:$0xff]
        %v423 = vld [vmem:[#allocation2 + $0x198] sm:$0xff]
        %v424 = vld [vmem:[#allocation2 + $0x1a0] sm:$0xff]
        %v425 = vld [vmem:[#allocation2 + $0x1a8] sm:$0xff]
        %v426 = vld [vmem:[#allocation2 + $0x1b0] sm:$0xff]
        %v427 = vld [vmem:[#allocation2 + $0x1b8] sm:$0xff]
        %v428 = vld [vmem:[#allocation2 + $0x1c0] sm:$0xff]
        %v429 = vld [vmem:[#allocation2 + $0x1c8] sm:$0xff]
        %v430 = vld [vmem:[#allocation2 + $0x1d0] sm:$0xff]
        %v431 = vld [vmem:[#allocation2 + $0x1d8] sm:$0xff]
        %v432 = vld [vmem:[#allocation2 + $0x1e0] sm:$0xff]
        %v433 = vld [vmem:[#allocation2 + $0x1e8] sm:$0xff]
        %v434 = vld [vmem:[#allocation2 + $0x1f0] sm:$0xff]
        %v435 = vld [vmem:[#allocation2 + $0x1f8] sm:$0xff]
        %v436 = vld [vmem:[#allocation2 + $0x200] sm:$0xff]
        %v437 = vld [vmem:[#allocation2 + $0x208] sm:$0xff]
        %v438 = vld [vmem:[#allocation2 + $0x210] sm:$0xff]
        %v439 = vld [vmem:[#allocation2 + $0x218] sm:$0xff]
        %v440 = vld [vmem:[#allocation2 + $0x220] sm:$0xff]
        %v441 = vld [vmem:[#allocation2 + $0x228] sm:$0xff]
        %v442 = vld [vmem:[#allocation2 + $0x230] sm:$0xff]
        %v443 = vld [vmem:[#allocation2 + $0x238] sm:$0xff]
        %v444 = vld [vmem:[#allocation2 + $0x240] sm:$0xff]
        %v445 = vld [vmem:[#allocation2 + $0x248] sm:$0xff]
        %v446 = vld [vmem:[#allocation2 + $0x250] sm:$0xff]
        %v447 = vld [vmem:[#allocation2 + $0x258] sm:$0xff]
        %v448 = vld [vmem:[#allocation2 + $0x260] sm:$0xff]
        %v449 = vld [vmem:[#allocation2 + $0x268] sm:$0xff]
        %v450 = vld [vmem:[#allocation2 + $0x270] sm:$0xff]
        %v451 = vld [vmem:[#allocation2 + $0x278] sm:$0xff]
        %v452 = vld [vmem:[#allocation2 + $0x280] sm:$0xff]
        %v453 = vld [vmem:[#allocation2 + $0x288] sm:$0xff]
        %v454 = vld [vmem:[#allocation2 + $0x290] sm:$0xff]
        %v455 = vld [vmem:[#allocation2 + $0x298] sm:$0xff]
        %v456 = vld [vmem:[#allocation2 + $0x2a0] sm:$0xff]
        %v457 = vld [vmem:[#allocation2 + $0x2a8] sm:$0xff]
        %v458 = vld [vmem:[#allocation2 + $0x2b0] sm:$0xff]
        %v459 = vld [vmem:[#allocation2 + $0x2b8] sm:$0xff]
        %v460 = vld [vmem:[#allocation2 + $0x2c0] sm:$0xff]
        %v461 = vld [vmem:[#allocation2 + $0x2c8] sm:$0xff]
        %v462 = vld [vmem:[#allocation2 + $0x2d0] sm:$0xff]
        %v463 = vld [vmem:[#allocation2 + $0x2d8] sm:$0xff]
        %v464 = vld [vmem:[#allocation2 + $0x2e0] sm:$0xff]
        %v465 = vld [vmem:[#allocation2 + $0x2e8] sm:$0xff]
        %v466 = vld [vmem:[#allocation2 + $0x2f0] sm:$0xff]
        %v467 = vld [vmem:[#allocation2 + $0x2f8] sm:$0xff]
        %v468 = vld [vmem:[#allocation2 + $0x300] sm:$0xff]
        %v469 = vld [vmem:[#allocation2 + $0x308] sm:$0xff]
        %v470 = vld [vmem:[#allocation2 + $0x310] sm:$0xff]
        %v471 = vld [vmem:[#allocation2 + $0x318] sm:$0xff]
        %v472 = vld [vmem:[#allocation2 + $0x320] sm:$0xff]
        %v473 = vld [vmem:[#allocation2 + $0x328] sm:$0xff]
        %v474 = vld [vmem:[#allocation2 + $0x330] sm:$0xff]
        %v475 = vld [vmem:[#allocation2 + $0x338] sm:$0xff]
        %v476 = vld [vmem:[#allocation2 + $0x340] sm:$0xff]
        %v477 = vld [vmem:[#allocation2 + $0x348] sm:$0xff]
        %v478 = vld [vmem:[#allocation2 + $0x350] sm:$0xff]
        %v479 = vld [vmem:[#allocation2 + $0x358] sm:$0xff]
        %v480 = vld [vmem:[#allocation2 + $0x360] sm:$0xff]
        %v481 = vld [vmem:[#allocation2 + $0x368] sm:$0xff]
        %v482 = vld [vmem:[#allocation2 + $0x370] sm:$0xff]
        %v483 = vld [vmem:[#allocation2 + $0x378] sm:$0xff]
        %v484 = vld [vmem:[#allocation2 + $0x380] sm:$0xff]
        %v485 = vld [vmem:[#allocation2 + $0x388] sm:$0xff]
        %v486 = vld [vmem:[#allocation2 + $0x390] sm:$0xff]
        %v487 = vld [vmem:[#allocation2 + $0x398] sm:$0xff]
        %v488 = vld [vmem:[#allocation2 + $0x3a0] sm:$0xff]
        %v489 = vld [vmem:[#allocation2 + $0x3a8] sm:$0xff]
        %v490 = vld [vmem:[#allocation2 + $0x3b0] sm:$0xff]
        %v491 = vld [vmem:[#allocation2 + $0x3b8] sm:$0xff]
        %v492 = vld [vmem:[#allocation2 + $0x3c0] sm:$0xff]
        %v493 = vld [vmem:[#allocation2 + $0x3c8] sm:$0xff]
        %v494 = vld [vmem:[#allocation2 + $0x3d0] sm:$0xff]
        %v495 = vld [vmem:[#allocation2 + $0x3d8] sm:$0xff]
        %v496 = vld [vmem:[#allocation2 + $0x3e0] sm:$0xff]
        %v497 = vld [vmem:[#allocation2 + $0x3e8] sm:$0xff]
        %v498 = vld [vmem:[#allocation2 + $0x3f0] sm:$0xff]
        %v499 = vld [vmem:[#allocation2 + $0x3f8] sm:$0xff]
        %v500 = vld [vmem:[#allocation2 + $0x400] sm:$0xff]
        %v501 = vld [vmem:[#allocation2 + $0x408] sm:$0xff]
        %v502 = vld [vmem:[#allocation2 + $0x410] sm:$0xff]
        %v503 = vld [vmem:[#allocation2 + $0x418] sm:$0xff]
        %v504 = vld [vmem:[#allocation2 + $0x420] sm:$0xff]
        %v505 = vld [vmem:[#allocation2 + $0x428] sm:$0xff]
        %v506 = vld [vmem:[#allocation2 + $0x430] sm:$0xff]
        %v507 = vld [vmem:[#allocation2 + $0x438] sm:$0xff]
        %v508 = vld [vmem:[#allocation2 + $0x440] sm:$0xff]
        %v509 = vld [vmem:[#allocation2 + $0x448] sm:$0xff]
        %v510 = vld [vmem:[#allocation2 + $0x450] sm:$0xff]
        %v511 = vld [vmem:[#allocation2 + $0x458] sm:$0xff]
        %v512 = vld [vmem:[#allocation2 + $0x460] sm:$0xff]
        %v513 = vld [vmem:[#allocation2 + $0x468] sm:$0xff]
        %v514 = vld [vmem:[#allocation2 + $0x470] sm:$0xff]
        %v515 = vld [vmem:[#allocation2 + $0x478] sm:$0xff]
        %v516 = vld [vmem:[#allocation2 + $0x480] sm:$0xff]
        %v517 = vld [vmem:[#allocation2 + $0x488] sm:$0xff]
        %v518 = vld [vmem:[#allocation2 + $0x490] sm:$0xff]
        %v519 = vld [vmem:[#allocation2 + $0x498] sm:$0xff]
        %v520 = vld [vmem:[#allocation2 + $0x4a0] sm:$0xff]
        %v521 = vld [vmem:[#allocation2 + $0x4a8] sm:$0xff]
        %v522 = vld [vmem:[#allocation2 + $0x4b0] sm:$0xff]
        %v523 = vld [vmem:[#allocation2 + $0x4b8] sm:$0xff]
        %v524 = vld [vmem:[#allocation2 + $0x4c0] sm:$0xff]
        %v525 = vld [vmem:[#allocation2 + $0x4c8] sm:$0xff]
        %v526 = vld [vmem:[#allocation2 + $0x4d0] sm:$0xff]
        %v527 = vld [vmem:[#allocation2 + $0x4d8] sm:$0xff]
        %v528 = vld [vmem:[#allocation2 + $0x4e0] sm:$0xff]
        %v529 = vld [vmem:[#allocation2 + $0x4e8] sm:$0xff]
        %v530 = vld [vmem:[#allocation2 + $0x4f0] sm:$0xff]
        %v531 = vld [vmem:[#allocation2 + $0x4f8] sm:$0xff]
        %v532 = vld [vmem:[#allocation2 + $0x500] sm:$0xff]
        %v533 = vld [vmem:[#allocation2 + $0x508] sm:$0xff]
        %v534 = vld [vmem:[#allocation2 + $0x510] sm:$0xff]
        %v535 = vld [vmem:[#allocation2 + $0x518] sm:$0xff]
        %v536 = vld [vmem:[#allocation2 + $0x520] sm:$0xff]
        %v537 = vld [vmem:[#allocation2 + $0x528] sm:$0xff]
        %v538 = vld [vmem:[#allocation2 + $0x530] sm:$0xff]
        %v539 = vld [vmem:[#allocation2 + $0x538] sm:$0xff]
        %v540 = vld [vmem:[#allocation2 + $0x540] sm:$0xff]
        %v541 = vld [vmem:[#allocation2 + $0x548] sm:$0xff]
        %v542 = vld [vmem:[#allocation2 + $0x550] sm:$0xff]
        %v543 = vld [vmem:[#allocation2 + $0x558] sm:$0xff]
        %v544 = vld [vmem:[#allocation2 + $0x560] sm:$0xff]
        %v545 = vld [vmem:[#allocation2 + $0x568] sm:$0xff]
        %v546 = vld [vmem:[#allocation2 + $0x570] sm:$0xff]
        %v547 = vld [vmem:[#allocation2 + $0x578] sm:$0xff]
        %v548 = vld [vmem:[#allocation2 + $0x580] sm:$0xff]
        %v549 = vld [vmem:[#allocation2 + $0x588] sm:$0xff]
        %v550 = vld [vmem:[#allocation2 + $0x590] sm:$0xff]
        %v551 = vld [vmem:[#allocation2 + $0x598] sm:$0xff]
        %v552 = vld [vmem:[#allocation2 + $0x5a0] sm:$0xff]
        %v553 = vld [vmem:[#allocation2 + $0x5a8] sm:$0xff]
        %v554 = vld [vmem:[#allocation2 + $0x5b0] sm:$0xff]
        %v555 = vld [vmem:[#allocation2 + $0x5b8] sm:$0xff]
        %v556 = vld [vmem:[#allocation2 + $0x5c0] sm:$0xff]
        %v557 = vld [vmem:[#allocation2 + $0x5c8] sm:$0xff]
        %v558 = vld [vmem:[#allocation2 + $0x5d0] sm:$0xff]
        %v559 = vld [vmem:[#allocation2 + $0x5d8] sm:$0xff]
        %v560 = vld [vmem:[#allocation2 + $0x5e0] sm:$0xff]
        %v561 = vld [vmem:[#allocation2 + $0x5e8] sm:$0xff]
        %v562 = vld [vmem:[#allocation2 + $0x5f0] sm:$0xff]
        %v563 = vld [vmem:[#allocation2 + $0x5f8] sm:$0xff]
        %v564 = vld [vmem:[#allocation2 + $0x600] sm:$0xff]
        %v565 = vld [vmem:[#allocation2 + $0x608] sm:$0xff]
        %v566 = vld [vmem:[#allocation2 + $0x610] sm:$0xff]
        %v567 = vld [vmem:[#allocation2 + $0x618] sm:$0xff]
        %v568 = vld [vmem:[#allocation2 + $0x620] sm:$0xff]
        %v569 = vld [vmem:[#allocation2 + $0x628] sm:$0xff]
        %v570 = vld [vmem:[#allocation2 + $0x630] sm:$0xff]
        %v571 = vld [vmem:[#allocation2 + $0x638] sm:$0xff]
        %v572 = vld [vmem:[#allocation2 + $0x640] sm:$0xff]
        %v573 = vld [vmem:[#allocation2 + $0x648] sm:$0xff]
        %v574 = vld [vmem:[#allocation2 + $0x650] sm:$0xff]
        %v575 = vld [vmem:[#allocation2 + $0x658] sm:$0xff]
        %v576 = vld [vmem:[#allocation2 + $0x660] sm:$0xff]
        %v577 = vld [vmem:[#allocation2 + $0x668] sm:$0xff]
        %v578 = vld [vmem:[#allocation2 + $0x670] sm:$0xff]
        %v579 = vld [vmem:[#allocation2 + $0x678] sm:$0xff]
        %v580 = vld [vmem:[#allocation2 + $0x680] sm:$0xff]
        %v581 = vld [vmem:[#allocation2 + $0x688] sm:$0xff]
        %v582 = vld [vmem:[#allocation2 + $0x690] sm:$0xff]
        %v583 = vld [vmem:[#allocation2 + $0x698] sm:$0xff]
        %v584 = vld [vmem:[#allocation2 + $0x6a0] sm:$0xff]
        %v585 = vld [vmem:[#allocation2 + $0x6a8] sm:$0xff]
        %v586 = vld [vmem:[#allocation2 + $0x6b0] sm:$0xff]
        %v587 = vld [vmem:[#allocation2 + $0x6b8] sm:$0xff]
        %v588 = vld [vmem:[#allocation2 + $0x6c0] sm:$0xff]
        %v589 = vld [vmem:[#allocation2 + $0x6c8] sm:$0xff]
        %v590 = vld [vmem:[#allocation2 + $0x6d0] sm:$0xff]
        %v591 = vld [vmem:[#allocation2 + $0x6d8] sm:$0xff]
        %v592 = vld [vmem:[#allocation2 + $0x6e0] sm:$0xff]
        %v593 = vld [vmem:[#allocation2 + $0x6e8] sm:$0xff]
        %v594 = vld [vmem:[#allocation2 + $0x6f0] sm:$0xff]
        %v595 = vld [vmem:[#allocation2 + $0x6f8] sm:$0xff]
        %v596 = vld [vmem:[#allocation2 + $0x700] sm:$0xff]
        %v597 = vld [vmem:[#allocation2 + $0x708] sm:$0xff]
        %v598 = vld [vmem:[#allocation2 + $0x710] sm:$0xff]
        %v599 = vld [vmem:[#allocation2 + $0x718] sm:$0xff]
        %v600 = vld [vmem:[#allocation2 + $0x720] sm:$0xff]
        %v601 = vld [vmem:[#allocation2 + $0x728] sm:$0xff]
        %v602 = vld [vmem:[#allocation2 + $0x730] sm:$0xff]
        %v603 = vld [vmem:[#allocation2 + $0x738] sm:$0xff]
        %v604 = vld [vmem:[#allocation2 + $0x740] sm:$0xff]
        %v605 = vld [vmem:[#allocation2 + $0x748] sm:$0xff]
        %v606 = vld [vmem:[#allocation2 + $0x750] sm:$0xff]
        %v607 = vld [vmem:[#allocation2 + $0x758] sm:$0xff]
        %v608 = vld [vmem:[#allocation2 + $0x760] sm:$0xff]
        %v609 = vld [vmem:[#allocation2 + $0x768] sm:$0xff]
        %v610 = vld [vmem:[#allocation2 + $0x770] sm:$0xff]
        %v611 = vld [vmem:[#allocation2 + $0x778] sm:$0xff]
        %v612 = vld [vmem:[#allocation2 + $0x780] sm:$0xff]
        %v613 = vld [vmem:[#allocation2 + $0x788] sm:$0xff]
        %v614 = vld [vmem:[#allocation2 + $0x790] sm:$0xff]
        %v615 = vld [vmem:[#allocation2 + $0x798] sm:$0xff]
        %v616 = vld [vmem:[#allocation2 + $0x7a0] sm:$0xff]
        %v617 = vld [vmem:[#allocation2 + $0x7a8] sm:$0xff]
        %v618 = vld [vmem:[#allocation2 + $0x7b0] sm:$0xff]
        %v619 = vld [vmem:[#allocation2 + $0x7b8] sm:$0xff]
        %v620 = vld [vmem:[#allocation2 + $0x7c0] sm:$0xff]
        %v621 = vld [vmem:[#allocation2 + $0x7c8] sm:$0xff]
        %v622 = vld [vmem:[#allocation2 + $0x7d0] sm:$0xff]
        %v623 = vld [vmem:[#allocation2 + $0x7d8] sm:$0xff]
        %v624 = vld [vmem:[#allocation2 + $0x7e0] sm:$0xff]
        %v625 = vld [vmem:[#allocation2 + $0x7e8] sm:$0xff]
        %v626 = vld [vmem:[#allocation2 + $0x7f0] sm:$0xff]
        %v627 = vld [vmem:[#allocation2 + $0x7f8] sm:$0xff]
        %v628 = vld [vmem:[#allocation2 + $0x800] sm:$0xff]
        %v629 = vld [vmem:[#allocation2 + $0x808] sm:$0xff]
        %v630 = vld [vmem:[#allocation2 + $0x810] sm:$0xff]
        %v631 = vld [vmem:[#allocation2 + $0x818] sm:$0xff]
        %v632 = vld [vmem:[#allocation2 + $0x820] sm:$0xff]
        %v633 = vld [vmem:[#allocation2 + $0x828] sm:$0xff]
        %v634 = vld [vmem:[#allocation2 + $0x830] sm:$0xff]
        %v635 = vld [vmem:[#allocation2 + $0x838] sm:$0xff]
        %v636 = vld [vmem:[#allocation2 + $0x840] sm:$0xff]
        %v637 = vld [vmem:[#allocation2 + $0x848] sm:$0xff]
        %v638 = vld [vmem:[#allocation2 + $0x850] sm:$0xff]
        %v639 = vld [vmem:[#allocation2 + $0x858] sm:$0xff]
        %v640 = vld [vmem:[#allocation2 + $0x860] sm:$0xff]
        %v641 = vld [vmem:[#allocation2 + $0x868] sm:$0xff]
        %v642 = vld [vmem:[#allocation2 + $0x870] sm:$0xff]
        %v643 = vld [vmem:[#allocation2 + $0x878] sm:$0xff]
        %v644 = vld [vmem:[#allocation2 + $0x880] sm:$0xff]
        %v645 = vld [vmem:[#allocation2 + $0x888] sm:$0xff]
        %v646 = vld [vmem:[#allocation2 + $0x890] sm:$0xff]
        %v647 = vld [vmem:[#allocation2 + $0x898] sm:$0xff]
        %v648 = vld [vmem:[#allocation2 + $0x8a0] sm:$0xff]
        %v649 = vld [vmem:[#allocation2 + $0x8a8] sm:$0xff]
        %v650 = vld [vmem:[#allocation2 + $0x8b0] sm:$0xff]
        %v651 = vld [vmem:[#allocation2 + $0x8b8] sm:$0xff]
        %v652 = vld [vmem:[#allocation2 + $0x8c0] sm:$0xff]
        %v653 = vld [vmem:[#allocation2 + $0x8c8] sm:$0xff]
        %v654 = vld [vmem:[#allocation2 + $0x8d0] sm:$0xff]
        %v655 = vld [vmem:[#allocation2 + $0x8d8] sm:$0xff]
        %v656 = vld [vmem:[#allocation2 + $0x8e0] sm:$0xff]
        %v657 = vld [vmem:[#allocation2 + $0x8e8] sm:$0xff]
        %v658 = vld [vmem:[#allocation2 + $0x8f0] sm:$0xff]
        %v659 = vld [vmem:[#allocation2 + $0x8f8] sm:$0xff]
        %v660 = vld [vmem:[#allocation4] sm:$0x3f]
        %v662 = vperm.slane %v660, 0
        %v663 = vperm.slane %v660, 1
        %v664 = vperm.slane %v660, 2
        %v665 = vperm.slane %v660, 3
        %v666 = vperm.slane %v660, 4
        %v667 = vperm.slane %v660, 5
        %v677 = vunpack.c.l.b16 %v369
        %v678 = vunpack.c.h.b16 %v369
        %v679 = vunpack.c.l.b16 %v370
        %v680 = vunpack.c.h.b16 %v370
        %v681 = vunpack.c.l.b16 %v371
        %v682 = vunpack.c.h.b16 %v371
        %v683 = vpack.c.b16 %v677, %v677
        %v684 = vpack.c.b16 %v678, %v678
        %v685 = vpack.c.b16 %v679, %v679
        %v686 = vpack.c.b16 %v680, %v680
        %v687 = vpack.c.b16 %v681, %v681
        %v688 = vpack.c.b16 %v682, %v682
        %v983 = vunpack.c.l.b16 %v372
        %v984 = vunpack.c.h.b16 %v372
        %v985 = vunpack.c.l.b16 %v373
        %v986 = vunpack.c.h.b16 %v373
        %v987 = vunpack.c.l.b16 %v374
        %v988 = vunpack.c.h.b16 %v374
        %v989 = vunpack.c.l.b16 %v375
        %v990 = vunpack.c.h.b16 %v375
        %v991 = vunpack.c.l.b16 %v376
        %v992 = vunpack.c.h.b16 %v376
        %v993 = vunpack.c.l.b16 %v377
        %v994 = vunpack.c.h.b16 %v377
        %v995 = vunpack.c.l.b16 %v378
        %v996 = vunpack.c.h.b16 %v378
        %v997 = vunpack.c.l.b16 %v379
        %v998 = vunpack.c.h.b16 %v379
        %v999 = vunpack.c.l.b16 %v380
        %v1000 = vunpack.c.h.b16 %v380
        %v1001 = vunpack.c.l.b16 %v381
        %v1002 = vunpack.c.h.b16 %v381
        %v1003 = vunpack.c.l.b16 %v382
        %v1004 = vunpack.c.h.b16 %v382
        %v1005 = vunpack.c.l.b16 %v383
        %v1006 = vunpack.c.h.b16 %v383
        %v1007 = vunpack.c.l.b16 %v384
        %v1008 = vunpack.c.h.b16 %v384
        %v1009 = vunpack.c.l.b16 %v385
        %v1010 = vunpack.c.h.b16 %v385
        %v1011 = vunpack.c.l.b16 %v386
        %v1012 = vunpack.c.h.b16 %v386
        %v1013 = vunpack.c.l.b16 %v387
        %v1014 = vunpack.c.h.b16 %v387
        %v1015 = vunpack.c.l.b16 %v388
        %v1016 = vunpack.c.h.b16 %v388
        %v1017 = vunpack.c.l.b16 %v389
        %v1018 = vunpack.c.h.b16 %v389
        %v1019 = vunpack.c.l.b16 %v390
        %v1020 = vunpack.c.h.b16 %v390
        %v1021 = vunpack.c.l.b16 %v391
        %v1022 = vunpack.c.h.b16 %v391
        %v1023 = vunpack.c.l.b16 %v392
        %v1024 = vunpack.c.h.b16 %v392
        %v1025 = vunpack.c.l.b16 %v393
        %v1026 = vunpack.c.h.b16 %v393
        %v1027 = vunpack.c.l.b16 %v394
        %v1028 = vunpack.c.h.b16 %v394
        %v1029 = vunpack.c.l.b16 %v395
        %v1030 = vunpack.c.h.b16 %v395
        %v1031 = vunpack.c.l.b16 %v396
        %v1032 = vunpack.c.h.b16 %v396
        %v1033 = vunpack.c.l.b16 %v397
        %v1034 = vunpack.c.h.b16 %v397
        %v1035 = vunpack.c.l.b16 %v398
        %v1036 = vunpack.c.h.b16 %v398
        %v1037 = vunpack.c.l.b16 %v399
        %v1038 = vunpack.c.h.b16 %v399
        %v1039 = vunpack.c.l.b16 %v400
        %v1040 = vunpack.c.h.b16 %v400
        %v1041 = vunpack.c.l.b16 %v401
        %v1042 = vunpack.c.h.b16 %v401
        %v1043 = vunpack.c.l.b16 %v402
        %v1044 = vunpack.c.h.b16 %v402
        %v1045 = vunpack.c.l.b16 %v403
        %v1046 = vunpack.c.h.b16 %v403
        %v1047 = vunpack.c.l.b16 %v404
        %v1048 = vunpack.c.h.b16 %v404
        %v1049 = vunpack.c.l.b16 %v405
        %v1050 = vunpack.c.h.b16 %v405
        %v1051 = vunpack.c.l.b16 %v406
        %v1052 = vunpack.c.h.b16 %v406
        %v1053 = vunpack.c.l.b16 %v407
        %v1054 = vunpack.c.h.b16 %v407
        %v1055 = vunpack.c.l.b16 %v408
        %v1056 = vunpack.c.h.b16 %v408
        %v1057 = vunpack.c.l.b16 %v409
        %v1058 = vunpack.c.h.b16 %v409
        %v1059 = vunpack.c.l.b16 %v410
        %v1060 = vunpack.c.h.b16 %v410
        %v1061 = vunpack.c.l.b16 %v411
        %v1062 = vunpack.c.h.b16 %v411
        %v1063 = vunpack.c.l.b16 %v412
        %v1064 = vunpack.c.h.b16 %v412
        %v1065 = vunpack.c.l.b16 %v413
        %v1066 = vunpack.c.h.b16 %v413
        %v1067 = vunpack.c.l.b16 %v414
        %v1068 = vunpack.c.h.b16 %v414
        %v1069 = vunpack.c.l.b16 %v415
        %v1070 = vunpack.c.h.b16 %v415
        %v1071 = vunpack.c.l.b16 %v416
        %v1072 = vunpack.c.h.b16 %v416
        %v1073 = vunpack.c.l.b16 %v417
        %v1074 = vunpack.c.h.b16 %v417
        %v1075 = vunpack.c.l.b16 %v418
        %v1076 = vunpack.c.h.b16 %v418
        %v1077 = vunpack.c.l.b16 %v419
        %v1078 = vunpack.c.h.b16 %v419
        %v1079 = vunpack.c.l.b16 %v420
        %v1080 = vunpack.c.h.b16 %v420
        %v1081 = vunpack.c.l.b16 %v421
        %v1082 = vunpack.c.h.b16 %v421
        %v1083 = vunpack.c.l.b16 %v422
        %v1084 = vunpack.c.h.b16 %v422
        %v1085 = vunpack.c.l.b16 %v423
        %v1086 = vunpack.c.h.b16 %v423
        %v1087 = vunpack.c.l.b16 %v424
        %v1088 = vunpack.c.h.b16 %v424
        %v1089 = vunpack.c.l.b16 %v425
        %v1090 = vunpack.c.h.b16 %v425
        %v1091 = vunpack.c.l.b16 %v426
        %v1092 = vunpack.c.h.b16 %v426
        %v1093 = vunpack.c.l.b16 %v427
        %v1094 = vunpack.c.h.b16 %v427
        %v1095 = vunpack.c.l.b16 %v428
        %v1096 = vunpack.c.h.b16 %v428
        %v1097 = vunpack.c.l.b16 %v429
        %v1098 = vunpack.c.h.b16 %v429
        %v1099 = vunpack.c.l.b16 %v430
        %v1100 = vunpack.c.h.b16 %v430
        %v1101 = vunpack.c.l.b16 %v431
        %v1102 = vunpack.c.h.b16 %v431
        %v1103 = vunpack.c.l.b16 %v432
        %v1104 = vunpack.c.h.b16 %v432
        %v1105 = vunpack.c.l.b16 %v433
        %v1106 = vunpack.c.h.b16 %v433
        %v1107 = vunpack.c.l.b16 %v434
        %v1108 = vunpack.c.h.b16 %v434
        %v1109 = vunpack.c.l.b16 %v435
        %v1110 = vunpack.c.h.b16 %v435
        %v1111 = vunpack.c.l.b16 %v436
        %v1112 = vunpack.c.h.b16 %v436
        %v1113 = vunpack.c.l.b16 %v437
        %v1114 = vunpack.c.h.b16 %v437
        %v1115 = vunpack.c.l.b16 %v438
        %v1116 = vunpack.c.h.b16 %v438
        %v1117 = vunpack.c.l.b16 %v439
        %v1118 = vunpack.c.h.b16 %v439
        %v1119 = vunpack.c.l.b16 %v440
        %v1120 = vunpack.c.h.b16 %v440
        %v1121 = vunpack.c.l.b16 %v441
        %v1122 = vunpack.c.h.b16 %v441
        %v1123 = vunpack.c.l.b16 %v442
        %v1124 = vunpack.c.h.b16 %v442
        %v1125 = vunpack.c.l.b16 %v443
        %v1126 = vunpack.c.h.b16 %v443
        %v1127 = vunpack.c.l.b16 %v444
        %v1128 = vunpack.c.h.b16 %v444
        %v1129 = vunpack.c.l.b16 %v445
        %v1130 = vunpack.c.h.b16 %v445
        %v1131 = vunpack.c.l.b16 %v446
        %v1132 = vunpack.c.h.b16 %v446
        %v1133 = vunpack.c.l.b16 %v447
        %v1134 = vunpack.c.h.b16 %v447
        %v1135 = vunpack.c.l.b16 %v448
        %v1136 = vunpack.c.h.b16 %v448
        %v1137 = vunpack.c.l.b16 %v449
        %v1138 = vunpack.c.h.b16 %v449
        %v1139 = vunpack.c.l.b16 %v450
        %v1140 = vunpack.c.h.b16 %v450
        %v1141 = vunpack.c.l.b16 %v451
        %v1142 = vunpack.c.h.b16 %v451
        %v1143 = vunpack.c.l.b16 %v452
        %v1144 = vunpack.c.h.b16 %v452
        %v1145 = vunpack.c.l.b16 %v453
        %v1146 = vunpack.c.h.b16 %v453
        %v1147 = vunpack.c.l.b16 %v454
        %v1148 = vunpack.c.h.b16 %v454
        %v1149 = vunpack.c.l.b16 %v455
        %v1150 = vunpack.c.h.b16 %v455
        %v1151 = vunpack.c.l.b16 %v456
        %v1152 = vunpack.c.h.b16 %v456
        %v1153 = vunpack.c.l.b16 %v457
        %v1154 = vunpack.c.h.b16 %v457
        %v1155 = vunpack.c.l.b16 %v458
        %v1156 = vunpack.c.h.b16 %v458
        %v1157 = vunpack.c.l.b16 %v459
        %v1158 = vunpack.c.h.b16 %v459
        %v1159 = vunpack.c.l.b16 %v460
        %v1160 = vunpack.c.h.b16 %v460
        %v1161 = vunpack.c.l.b16 %v461
        %v1162 = vunpack.c.h.b16 %v461
        %v1163 = vunpack.c.l.b16 %v462
        %v1164 = vunpack.c.h.b16 %v462
        %v1165 = vunpack.c.l.b16 %v463
        %v1166 = vunpack.c.h.b16 %v463
        %v1167 = vunpack.c.l.b16 %v464
        %v1168 = vunpack.c.h.b16 %v464
        %v1169 = vunpack.c.l.b16 %v465
        %v1170 = vunpack.c.h.b16 %v465
        %v1171 = vunpack.c.l.b16 %v466
        %v1172 = vunpack.c.h.b16 %v466
        %v1173 = vunpack.c.l.b16 %v467
        %v1174 = vunpack.c.h.b16 %v467
        %v1175 = vunpack.c.l.b16 %v468
        %v1176 = vunpack.c.h.b16 %v468
        %v1177 = vunpack.c.l.b16 %v469
        %v1178 = vunpack.c.h.b16 %v469
        %v1179 = vunpack.c.l.b16 %v470
        %v1180 = vunpack.c.h.b16 %v470
        %v1181 = vunpack.c.l.b16 %v471
        %v1182 = vunpack.c.h.b16 %v471
        %v1183 = vunpack.c.l.b16 %v472
        %v1184 = vunpack.c.h.b16 %v472
        %v1185 = vunpack.c.l.b16 %v473
        %v1186 = vunpack.c.h.b16 %v473
        %v1187 = vunpack.c.l.b16 %v474
        %v1188 = vunpack.c.h.b16 %v474
        %v1189 = vunpack.c.l.b16 %v475
        %v1190 = vunpack.c.h.b16 %v475
        %v1191 = vunpack.c.l.b16 %v476
        %v1192 = vunpack.c.h.b16 %v476
        %v1193 = vunpack.c.l.b16 %v477
        %v1194 = vunpack.c.h.b16 %v477
        %v1195 = vunpack.c.l.b16 %v478
        %v1196 = vunpack.c.h.b16 %v478
        %v1197 = vunpack.c.l.b16 %v479
        %v1198 = vunpack.c.h.b16 %v479
        %v1199 = vunpack.c.l.b16 %v480
        %v1200 = vunpack.c.h.b16 %v480
        %v1201 = vunpack.c.l.b16 %v481
        %v1202 = vunpack.c.h.b16 %v481
        %v1203 = vunpack.c.l.b16 %v482
        %v1204 = vunpack.c.h.b16 %v482
        %v1205 = vunpack.c.l.b16 %v483
        %v1206 = vunpack.c.h.b16 %v483
        %v1207 = vunpack.c.l.b16 %v484
        %v1208 = vunpack.c.h.b16 %v484
        %v1209 = vunpack.c.l.b16 %v485
        %v1210 = vunpack.c.h.b16 %v485
        %v1211 = vunpack.c.l.b16 %v486
        %v1212 = vunpack.c.h.b16 %v486
        %v1213 = vunpack.c.l.b16 %v487
        %v1214 = vunpack.c.h.b16 %v487
        %v1215 = vunpack.c.l.b16 %v488
        %v1216 = vunpack.c.h.b16 %v488
        %v1217 = vunpack.c.l.b16 %v489
        %v1218 = vunpack.c.h.b16 %v489
        %v1219 = vunpack.c.l.b16 %v490
        %v1220 = vunpack.c.h.b16 %v490
        %v1221 = vunpack.c.l.b16 %v491
        %v1222 = vunpack.c.h.b16 %v491
        %v1223 = vunpack.c.l.b16 %v492
        %v1224 = vunpack.c.h.b16 %v492
        %v1225 = vunpack.c.l.b16 %v493
        %v1226 = vunpack.c.h.b16 %v493
        %v1227 = vunpack.c.l.b16 %v494
        %v1228 = vunpack.c.h.b16 %v494
        %v1229 = vunpack.c.l.b16 %v495
        %v1230 = vunpack.c.h.b16 %v495
        %v1231 = vunpack.c.l.b16 %v496
        %v1232 = vunpack.c.h.b16 %v496
        %v1233 = vunpack.c.l.b16 %v497
        %v1234 = vunpack.c.h.b16 %v497
        %v1235 = vunpack.c.l.b16 %v498
        %v1236 = vunpack.c.h.b16 %v498
        %v1237 = vunpack.c.l.b16 %v499
        %v1238 = vunpack.c.h.b16 %v499
        %v1239 = vunpack.c.l.b16 %v500
        %v1240 = vunpack.c.h.b16 %v500
        %v1241 = vunpack.c.l.b16 %v501
        %v1242 = vunpack.c.h.b16 %v501
        %v1243 = vunpack.c.l.b16 %v502
        %v1244 = vunpack.c.h.b16 %v502
        %v1245 = vunpack.c.l.b16 %v503
        %v1246 = vunpack.c.h.b16 %v503
        %v1247 = vunpack.c.l.b16 %v504
        %v1248 = vunpack.c.h.b16 %v504
        %v1249 = vunpack.c.l.b16 %v505
        %v1250 = vunpack.c.h.b16 %v505
        %v1251 = vunpack.c.l.b16 %v506
        %v1252 = vunpack.c.h.b16 %v506
        %v1253 = vunpack.c.l.b16 %v507
        %v1254 = vunpack.c.h.b16 %v507
        %v1255 = vunpack.c.l.b16 %v508
        %v1256 = vunpack.c.h.b16 %v508
        %v1257 = vunpack.c.l.b16 %v509
        %v1258 = vunpack.c.h.b16 %v509
        %v1259 = vunpack.c.l.b16 %v510
        %v1260 = vunpack.c.h.b16 %v510
        %v1261 = vunpack.c.l.b16 %v511
        %v1262 = vunpack.c.h.b16 %v511
        %v1263 = vunpack.c.l.b16 %v512
        %v1264 = vunpack.c.h.b16 %v512
        %v1265 = vunpack.c.l.b16 %v513
        %v1266 = vunpack.c.h.b16 %v513
        %v1267 = vunpack.c.l.b16 %v514
        %v1268 = vunpack.c.h.b16 %v514
        %v1269 = vunpack.c.l.b16 %v515
        %v1270 = vunpack.c.h.b16 %v515
        %v1271 = vunpack.c.l.b16 %v516
        %v1272 = vunpack.c.h.b16 %v516
        %v1273 = vunpack.c.l.b16 %v517
        %v1274 = vunpack.c.h.b16 %v517
        %v1275 = vunpack.c.l.b16 %v518
        %v1276 = vunpack.c.h.b16 %v518
        %v1277 = vunpack.c.l.b16 %v519
        %v1278 = vunpack.c.h.b16 %v519
        %v1279 = vunpack.c.l.b16 %v520
        %v1280 = vunpack.c.h.b16 %v520
        %v1281 = vunpack.c.l.b16 %v521
        %v1282 = vunpack.c.h.b16 %v521
        %v1283 = vunpack.c.l.b16 %v522
        %v1284 = vunpack.c.h.b16 %v522
        %v1285 = vunpack.c.l.b16 %v523
        %v1286 = vunpack.c.h.b16 %v523
        %v1287 = vunpack.c.l.b16 %v524
        %v1288 = vunpack.c.h.b16 %v524
        %v1289 = vunpack.c.l.b16 %v525
        %v1290 = vunpack.c.h.b16 %v525
        %v1291 = vunpack.c.l.b16 %v526
        %v1292 = vunpack.c.h.b16 %v526
        %v1293 = vunpack.c.l.b16 %v527
        %v1294 = vunpack.c.h.b16 %v527
        %v1295 = vunpack.c.l.b16 %v528
        %v1296 = vunpack.c.h.b16 %v528
        %v1297 = vunpack.c.l.b16 %v529
        %v1298 = vunpack.c.h.b16 %v529
        %v1299 = vunpack.c.l.b16 %v530
        %v1300 = vunpack.c.h.b16 %v530
        %v1301 = vunpack.c.l.b16 %v531
        %v1302 = vunpack.c.h.b16 %v531
        %v1303 = vunpack.c.l.b16 %v532
        %v1304 = vunpack.c.h.b16 %v532
        %v1305 = vunpack.c.l.b16 %v533
        %v1306 = vunpack.c.h.b16 %v533
        %v1307 = vunpack.c.l.b16 %v534
        %v1308 = vunpack.c.h.b16 %v534
        %v1309 = vunpack.c.l.b16 %v535
        %v1310 = vunpack.c.h.b16 %v535
        %v1311 = vunpack.c.l.b16 %v536
        %v1312 = vunpack.c.h.b16 %v536
        %v1313 = vunpack.c.l.b16 %v537
        %v1314 = vunpack.c.h.b16 %v537
        %v1315 = vunpack.c.l.b16 %v538
        %v1316 = vunpack.c.h.b16 %v538
        %v1317 = vunpack.c.l.b16 %v539
        %v1318 = vunpack.c.h.b16 %v539
        %v1319 = vunpack.c.l.b16 %v540
        %v1320 = vunpack.c.h.b16 %v540
        %v1321 = vunpack.c.l.b16 %v541
        %v1322 = vunpack.c.h.b16 %v541
        %v1323 = vunpack.c.l.b16 %v542
        %v1324 = vunpack.c.h.b16 %v542
        %v1325 = vunpack.c.l.b16 %v543
        %v1326 = vunpack.c.h.b16 %v543
        %v1327 = vunpack.c.l.b16 %v544
        %v1328 = vunpack.c.h.b16 %v544
        %v1329 = vunpack.c.l.b16 %v545
        %v1330 = vunpack.c.h.b16 %v545
        %v1331 = vunpack.c.l.b16 %v546
        %v1332 = vunpack.c.h.b16 %v546
        %v1333 = vunpack.c.l.b16 %v547
        %v1334 = vunpack.c.h.b16 %v547
        %v1335 = vunpack.c.l.b16 %v548
        %v1336 = vunpack.c.h.b16 %v548
        %v1337 = vunpack.c.l.b16 %v549
        %v1338 = vunpack.c.h.b16 %v549
        %v1339 = vunpack.c.l.b16 %v550
        %v1340 = vunpack.c.h.b16 %v550
        %v1341 = vunpack.c.l.b16 %v551
        %v1342 = vunpack.c.h.b16 %v551
        %v1343 = vunpack.c.l.b16 %v552
        %v1344 = vunpack.c.h.b16 %v552
        %v1345 = vunpack.c.l.b16 %v553
        %v1346 = vunpack.c.h.b16 %v553
        %v1347 = vunpack.c.l.b16 %v554
        %v1348 = vunpack.c.h.b16 %v554
        %v1349 = vunpack.c.l.b16 %v555
        %v1350 = vunpack.c.h.b16 %v555
        %v1351 = vunpack.c.l.b16 %v556
        %v1352 = vunpack.c.h.b16 %v556
        %v1353 = vunpack.c.l.b16 %v557
        %v1354 = vunpack.c.h.b16 %v557
        %v1355 = vunpack.c.l.b16 %v558
        %v1356 = vunpack.c.h.b16 %v558
        %v1357 = vunpack.c.l.b16 %v559
        %v1358 = vunpack.c.h.b16 %v559
        %v1359 = vunpack.c.l.b16 %v560
        %v1360 = vunpack.c.h.b16 %v560
        %v1361 = vunpack.c.l.b16 %v561
        %v1362 = vunpack.c.h.b16 %v561
        %v1363 = vunpack.c.l.b16 %v562
        %v1364 = vunpack.c.h.b16 %v562
        %v1365 = vunpack.c.l.b16 %v563
        %v1366 = vunpack.c.h.b16 %v563
        %v1367 = vunpack.c.l.b16 %v564
        %v1368 = vunpack.c.h.b16 %v564
        %v1369 = vunpack.c.l.b16 %v565
        %v1370 = vunpack.c.h.b16 %v565
        %v1371 = vunpack.c.l.b16 %v566
        %v1372 = vunpack.c.h.b16 %v566
        %v1373 = vunpack.c.l.b16 %v567
        %v1374 = vunpack.c.h.b16 %v567
        %v1375 = vunpack.c.l.b16 %v568
        %v1376 = vunpack.c.h.b16 %v568
        %v1377 = vunpack.c.l.b16 %v569
        %v1378 = vunpack.c.h.b16 %v569
        %v1379 = vunpack.c.l.b16 %v570
        %v1380 = vunpack.c.h.b16 %v570
        %v1381 = vunpack.c.l.b16 %v571
        %v1382 = vunpack.c.h.b16 %v571
        %v1383 = vunpack.c.l.b16 %v572
        %v1384 = vunpack.c.h.b16 %v572
        %v1385 = vunpack.c.l.b16 %v573
        %v1386 = vunpack.c.h.b16 %v573
        %v1387 = vunpack.c.l.b16 %v574
        %v1388 = vunpack.c.h.b16 %v574
        %v1389 = vunpack.c.l.b16 %v575
        %v1390 = vunpack.c.h.b16 %v575
        %v1391 = vunpack.c.l.b16 %v576
        %v1392 = vunpack.c.h.b16 %v576
        %v1393 = vunpack.c.l.b16 %v577
        %v1394 = vunpack.c.h.b16 %v577
        %v1395 = vunpack.c.l.b16 %v578
        %v1396 = vunpack.c.h.b16 %v578
        %v1397 = vunpack.c.l.b16 %v579
        %v1398 = vunpack.c.h.b16 %v579
        %v1399 = vunpack.c.l.b16 %v580
        %v1400 = vunpack.c.h.b16 %v580
        %v1401 = vunpack.c.l.b16 %v581
        %v1402 = vunpack.c.h.b16 %v581
        %v1403 = vunpack.c.l.b16 %v582
        %v1404 = vunpack.c.h.b16 %v582
        %v1405 = vunpack.c.l.b16 %v583
        %v1406 = vunpack.c.h.b16 %v583
        %v1407 = vunpack.c.l.b16 %v584
        %v1408 = vunpack.c.h.b16 %v584
        %v1409 = vunpack.c.l.b16 %v585
        %v1410 = vunpack.c.h.b16 %v585
        %v1411 = vunpack.c.l.b16 %v586
        %v1412 = vunpack.c.h.b16 %v586
        %v1413 = vunpack.c.l.b16 %v587
        %v1414 = vunpack.c.h.b16 %v587
        %v1415 = vunpack.c.l.b16 %v588
        %v1416 = vunpack.c.h.b16 %v588
        %v1417 = vunpack.c.l.b16 %v589
        %v1418 = vunpack.c.h.b16 %v589
        %v1419 = vunpack.c.l.b16 %v590
        %v1420 = vunpack.c.h.b16 %v590
        %v1421 = vunpack.c.l.b16 %v591
        %v1422 = vunpack.c.h.b16 %v591
        %v1423 = vunpack.c.l.b16 %v592
        %v1424 = vunpack.c.h.b16 %v592
        %v1425 = vunpack.c.l.b16 %v593
        %v1426 = vunpack.c.h.b16 %v593
        %v1427 = vunpack.c.l.b16 %v594
        %v1428 = vunpack.c.h.b16 %v594
        %v1429 = vunpack.c.l.b16 %v595
        %v1430 = vunpack.c.h.b16 %v595
        %v1431 = vunpack.c.l.b16 %v596
        %v1432 = vunpack.c.h.b16 %v596
        %v1433 = vunpack.c.l.b16 %v597
        %v1434 = vunpack.c.h.b16 %v597
        %v1435 = vunpack.c.l.b16 %v598
        %v1436 = vunpack.c.h.b16 %v598
        %v1437 = vunpack.c.l.b16 %v599
        %v1438 = vunpack.c.h.b16 %v599
        %v1439 = vunpack.c.l.b16 %v600
        %v1440 = vunpack.c.h.b16 %v600
        %v1441 = vunpack.c.l.b16 %v601
        %v1442 = vunpack.c.h.b16 %v601
        %v1443 = vunpack.c.l.b16 %v602
        %v1444 = vunpack.c.h.b16 %v602
        %v1445 = vunpack.c.l.b16 %v603
        %v1446 = vunpack.c.h.b16 %v603
        %v1447 = vunpack.c.l.b16 %v604
        %v1448 = vunpack.c.h.b16 %v604
        %v1449 = vunpack.c.l.b16 %v605
        %v1450 = vunpack.c.h.b16 %v605
        %v1451 = vunpack.c.l.b16 %v606
        %v1452 = vunpack.c.h.b16 %v606
        %v1453 = vunpack.c.l.b16 %v607
        %v1454 = vunpack.c.h.b16 %v607
        %v1455 = vunpack.c.l.b16 %v608
        %v1456 = vunpack.c.h.b16 %v608
        %v1457 = vunpack.c.l.b16 %v609
        %v1458 = vunpack.c.h.b16 %v609
        %v1459 = vunpack.c.l.b16 %v610
        %v1460 = vunpack.c.h.b16 %v610
        %v1461 = vunpack.c.l.b16 %v611
        %v1462 = vunpack.c.h.b16 %v611
        %v1463 = vunpack.c.l.b16 %v612
        %v1464 = vunpack.c.h.b16 %v612
        %v1465 = vunpack.c.l.b16 %v613
        %v1466 = vunpack.c.h.b16 %v613
        %v1467 = vunpack.c.l.b16 %v614
        %v1468 = vunpack.c.h.b16 %v614
        %v1469 = vunpack.c.l.b16 %v615
        %v1470 = vunpack.c.h.b16 %v615
        %v1471 = vunpack.c.l.b16 %v616
        %v1472 = vunpack.c.h.b16 %v616
        %v1473 = vunpack.c.l.b16 %v617
        %v1474 = vunpack.c.h.b16 %v617
        %v1475 = vunpack.c.l.b16 %v618
        %v1476 = vunpack.c.h.b16 %v618
        %v1477 = vunpack.c.l.b16 %v619
        %v1478 = vunpack.c.h.b16 %v619
        %v1479 = vunpack.c.l.b16 %v620
        %v1480 = vunpack.c.h.b16 %v620
        %v1481 = vunpack.c.l.b16 %v621
        %v1482 = vunpack.c.h.b16 %v621
        %v1483 = vunpack.c.l.b16 %v622
        %v1484 = vunpack.c.h.b16 %v622
        %v1485 = vunpack.c.l.b16 %v623
        %v1486 = vunpack.c.h.b16 %v623
        %v1487 = vunpack.c.l.b16 %v624
        %v1488 = vunpack.c.h.b16 %v624
        %v1489 = vunpack.c.l.b16 %v625
        %v1490 = vunpack.c.h.b16 %v625
        %v1491 = vunpack.c.l.b16 %v626
        %v1492 = vunpack.c.h.b16 %v626
        %v1493 = vunpack.c.l.b16 %v627
        %v1494 = vunpack.c.h.b16 %v627
        %v1495 = vunpack.c.l.b16 %v628
        %v1496 = vunpack.c.h.b16 %v628
        %v1497 = vunpack.c.l.b16 %v629
        %v1498 = vunpack.c.h.b16 %v629
        %v1499 = vunpack.c.l.b16 %v630
        %v1500 = vunpack.c.h.b16 %v630
        %v1501 = vunpack.c.l.b16 %v631
        %v1502 = vunpack.c.h.b16 %v631
        %v1503 = vunpack.c.l.b16 %v632
        %v1504 = vunpack.c.h.b16 %v632
        %v1505 = vunpack.c.l.b16 %v633
        %v1506 = vunpack.c.h.b16 %v633
        %v1507 = vunpack.c.l.b16 %v634
        %v1508 = vunpack.c.h.b16 %v634
        %v1509 = vunpack.c.l.b16 %v635
        %v1510 = vunpack.c.h.b16 %v635
        %v1511 = vunpack.c.l.b16 %v636
        %v1512 = vunpack.c.h.b16 %v636
        %v1513 = vunpack.c.l.b16 %v637
        %v1514 = vunpack.c.h.b16 %v637
        %v1515 = vunpack.c.l.b16 %v638
        %v1516 = vunpack.c.h.b16 %v638
        %v1517 = vunpack.c.l.b16 %v639
        %v1518 = vunpack.c.h.b16 %v639
        %v1519 = vunpack.c.l.b16 %v640
        %v1520 = vunpack.c.h.b16 %v640
        %v1521 = vunpack.c.l.b16 %v641
        %v1522 = vunpack.c.h.b16 %v641
        %v1523 = vunpack.c.l.b16 %v642
        %v1524 = vunpack.c.h.b16 %v642
        %v1525 = vunpack.c.l.b16 %v643
        %v1526 = vunpack.c.h.b16 %v643
        %v1527 = vunpack.c.l.b16 %v644
        %v1528 = vunpack.c.h.b16 %v644
        %v1529 = vunpack.c.l.b16 %v645
        %v1530 = vunpack.c.h.b16 %v645
        %v1531 = vunpack.c.l.b16 %v646
        %v1532 = vunpack.c.h.b16 %v646
        %v1533 = vunpack.c.l.b16 %v647
        %v1534 = vunpack.c.h.b16 %v647
        %v1535 = vunpack.c.l.b16 %v648
        %v1536 = vunpack.c.h.b16 %v648
        %v1537 = vunpack.c.l.b16 %v649
        %v1538 = vunpack.c.h.b16 %v649
        %v1539 = vunpack.c.l.b16 %v650
        %v1540 = vunpack.c.h.b16 %v650
        %v1541 = vunpack.c.l.b16 %v651
        %v1542 = vunpack.c.h.b16 %v651
        %v1543 = vunpack.c.l.b16 %v652
        %v1544 = vunpack.c.h.b16 %v652
        %v1545 = vunpack.c.l.b16 %v653
        %v1546 = vunpack.c.h.b16 %v653
        %v1547 = vunpack.c.l.b16 %v654
        %v1548 = vunpack.c.h.b16 %v654
        %v1549 = vunpack.c.l.b16 %v655
        %v1550 = vunpack.c.h.b16 %v655
        %v1551 = vunpack.c.l.b16 %v656
        %v1552 = vunpack.c.h.b16 %v656
        %v1553 = vunpack.c.l.b16 %v657
        %v1554 = vunpack.c.h.b16 %v657
        %v1555 = vunpack.c.l.b16 %v658
        %v1556 = vunpack.c.h.b16 %v658
        %v1557 = vunpack.c.l.b16 %v659
        %v1558 = vunpack.c.h.b16 %v659
        %v1559 = vpack.c.b16 %v989, %v983
        %v1560 = vpack.c.b16 %v990, %v984
        %v1561 = vpack.c.b16 %v991, %v985
        %v1562 = vpack.c.b16 %v992, %v986
        %v1563 = vpack.c.b16 %v993, %v987
        %v1564 = vpack.c.b16 %v994, %v988
        %v1565 = vpack.c.b16 %v1001, %v995
        %v1566 = vpack.c.b16 %v1002, %v996
        %v1567 = vpack.c.b16 %v1003, %v997
        %v1568 = vpack.c.b16 %v1004, %v998
        %v1569 = vpack.c.b16 %v1005, %v999
        %v1570 = vpack.c.b16 %v1006, %v1000
        %v1571 = vpack.c.b16 %v1013, %v1007
        %v1572 = vpack.c.b16 %v1014, %v1008
        %v1573 = vpack.c.b16 %v1015, %v1009
        %v1574 = vpack.c.b16 %v1016, %v1010
        %v1575 = vpack.c.b16 %v1017, %v1011
        %v1576 = vpack.c.b16 %v1018, %v1012
        %v1577 = vpack.c.b16 %v1025, %v1019
        %v1578 = vpack.c.b16 %v1026, %v1020
        %v1579 = vpack.c.b16 %v1027, %v1021
        %v1580 = vpack.c.b16 %v1028, %v1022
        %v1581 = vpack.c.b16 %v1029, %v1023
        %v1582 = vpack.c.b16 %v1030, %v1024
        %v1583 = vpack.c.b16 %v1037, %v1031
        %v1584 = vpack.c.b16 %v1038, %v1032
        %v1585 = vpack.c.b16 %v1039, %v1033
        %v1586 = vpack.c.b16 %v1040, %v1034
        %v1587 = vpack.c.b16 %v1041, %v1035
        %v1588 = vpack.c.b16 %v1042, %v1036
        %v1589 = vpack.c.b16 %v1049, %v1043
        %v1590 = vpack.c.b16 %v1050, %v1044
        %v1591 = vpack.c.b16 %v1051, %v1045
        %v1592 = vpack.c.b16 %v1052, %v1046
        %v1593 = vpack.c.b16 %v1053, %v1047
        %v1594 = vpack.c.b16 %v1054, %v1048
        %v1595 = vpack.c.b16 %v1061, %v1055
        %v1596 = vpack.c.b16 %v1062, %v1056
        %v1597 = vpack.c.b16 %v1063, %v1057
        %v1598 = vpack.c.b16 %v1064, %v1058
        %v1599 = vpack.c.b16 %v1065, %v1059
        %v1600 = vpack.c.b16 %v1066, %v1060
        %v1601 = vpack.c.b16 %v1073, %v1067
        %v1602 = vpack.c.b16 %v1074, %v1068
        %v1603 = vpack.c.b16 %v1075, %v1069
        %v1604 = vpack.c.b16 %v1076, %v1070
        %v1605 = vpack.c.b16 %v1077, %v1071
        %v1606 = vpack.c.b16 %v1078, %v1072
        %v1607 = vpack.c.b16 %v1085, %v1079
        %v1608 = vpack.c.b16 %v1086, %v1080
        %v1609 = vpack.c.b16 %v1087, %v1081
        %v1610 = vpack.c.b16 %v1088, %v1082
        %v1611 = vpack.c.b16 %v1089, %v1083
        %v1612 = vpack.c.b16 %v1090, %v1084
        %v1613 = vpack.c.b16 %v1097, %v1091
        %v1614 = vpack.c.b16 %v1098, %v1092
        %v1615 = vpack.c.b16 %v1099, %v1093
        %v1616 = vpack.c.b16 %v1100, %v1094
        %v1617 = vpack.c.b16 %v1101, %v1095
        %v1618 = vpack.c.b16 %v1102, %v1096
        %v1619 = vpack.c.b16 %v1109, %v1103
        %v1620 = vpack.c.b16 %v1110, %v1104
        %v1621 = vpack.c.b16 %v1111, %v1105
        %v1622 = vpack.c.b16 %v1112, %v1106
        %v1623 = vpack.c.b16 %v1113, %v1107
        %v1624 = vpack.c.b16 %v1114, %v1108
        %v1625 = vpack.c.b16 %v1121, %v1115
        %v1626 = vpack.c.b16 %v1122, %v1116
        %v1627 = vpack.c.b16 %v1123, %v1117
        %v1628 = vpack.c.b16 %v1124, %v1118
        %v1629 = vpack.c.b16 %v1125, %v1119
        %v1630 = vpack.c.b16 %v1126, %v1120
        %v1631 = vpack.c.b16 %v1133, %v1127
        %v1632 = vpack.c.b16 %v1134, %v1128
        %v1633 = vpack.c.b16 %v1135, %v1129
        %v1634 = vpack.c.b16 %v1136, %v1130
        %v1635 = vpack.c.b16 %v1137, %v1131
        %v1636 = vpack.c.b16 %v1138, %v1132
        %v1637 = vpack.c.b16 %v1145, %v1139
        %v1638 = vpack.c.b16 %v1146, %v1140
        %v1639 = vpack.c.b16 %v1147, %v1141
        %v1640 = vpack.c.b16 %v1148, %v1142
        %v1641 = vpack.c.b16 %v1149, %v1143
        %v1642 = vpack.c.b16 %v1150, %v1144
        %v1643 = vpack.c.b16 %v1157, %v1151
        %v1644 = vpack.c.b16 %v1158, %v1152
        %v1645 = vpack.c.b16 %v1159, %v1153
        %v1646 = vpack.c.b16 %v1160, %v1154
        %v1647 = vpack.c.b16 %v1161, %v1155
        %v1648 = vpack.c.b16 %v1162, %v1156
        %v1649 = vpack.c.b16 %v1169, %v1163
        %v1650 = vpack.c.b16 %v1170, %v1164
        %v1651 = vpack.c.b16 %v1171, %v1165
        %v1652 = vpack.c.b16 %v1172, %v1166
        %v1653 = vpack.c.b16 %v1173, %v1167
        %v1654 = vpack.c.b16 %v1174, %v1168
        %v1655 = vpack.c.b16 %v1181, %v1175
        %v1656 = vpack.c.b16 %v1182, %v1176
        %v1657 = vpack.c.b16 %v1183, %v1177
        %v1658 = vpack.c.b16 %v1184, %v1178
        %v1659 = vpack.c.b16 %v1185, %v1179
        %v1660 = vpack.c.b16 %v1186, %v1180
        %v1661 = vpack.c.b16 %v1193, %v1187
        %v1662 = vpack.c.b16 %v1194, %v1188
        %v1663 = vpack.c.b16 %v1195, %v1189
        %v1664 = vpack.c.b16 %v1196, %v1190
        %v1665 = vpack.c.b16 %v1197, %v1191
        %v1666 = vpack.c.b16 %v1198, %v1192
        %v1667 = vpack.c.b16 %v1205, %v1199
        %v1668 = vpack.c.b16 %v1206, %v1200
        %v1669 = vpack.c.b16 %v1207, %v1201
        %v1670 = vpack.c.b16 %v1208, %v1202
        %v1671 = vpack.c.b16 %v1209, %v1203
        %v1672 = vpack.c.b16 %v1210, %v1204
        %v1673 = vpack.c.b16 %v1217, %v1211
        %v1674 = vpack.c.b16 %v1218, %v1212
        %v1675 = vpack.c.b16 %v1219, %v1213
        %v1676 = vpack.c.b16 %v1220, %v1214
        %v1677 = vpack.c.b16 %v1221, %v1215
        %v1678 = vpack.c.b16 %v1222, %v1216
        %v1679 = vpack.c.b16 %v1229, %v1223
        %v1680 = vpack.c.b16 %v1230, %v1224
        %v1681 = vpack.c.b16 %v1231, %v1225
        %v1682 = vpack.c.b16 %v1232, %v1226
        %v1683 = vpack.c.b16 %v1233, %v1227
        %v1684 = vpack.c.b16 %v1234, %v1228
        %v1685 = vpack.c.b16 %v1241, %v1235
        %v1686 = vpack.c.b16 %v1242, %v1236
        %v1687 = vpack.c.b16 %v1243, %v1237
        %v1688 = vpack.c.b16 %v1244, %v1238
        %v1689 = vpack.c.b16 %v1245, %v1239
        %v1690 = vpack.c.b16 %v1246, %v1240
        %v1691 = vpack.c.b16 %v1253, %v1247
        %v1692 = vpack.c.b16 %v1254, %v1248
        %v1693 = vpack.c.b16 %v1255, %v1249
        %v1694 = vpack.c.b16 %v1256, %v1250
        %v1695 = vpack.c.b16 %v1257, %v1251
        %v1696 = vpack.c.b16 %v1258, %v1252
        %v1697 = vpack.c.b16 %v1265, %v1259
        %v1698 = vpack.c.b16 %v1266, %v1260
        %v1699 = vpack.c.b16 %v1267, %v1261
        %v1700 = vpack.c.b16 %v1268, %v1262
        %v1701 = vpack.c.b16 %v1269, %v1263
        %v1702 = vpack.c.b16 %v1270, %v1264
        %v1703 = vpack.c.b16 %v1277, %v1271
        %v1704 = vpack.c.b16 %v1278, %v1272
        %v1705 = vpack.c.b16 %v1279, %v1273
        %v1706 = vpack.c.b16 %v1280, %v1274
        %v1707 = vpack.c.b16 %v1281, %v1275
        %v1708 = vpack.c.b16 %v1282, %v1276
        %v1709 = vpack.c.b16 %v1289, %v1283
        %v1710 = vpack.c.b16 %v1290, %v1284
        %v1711 = vpack.c.b16 %v1291, %v1285
        %v1712 = vpack.c.b16 %v1292, %v1286
        %v1713 = vpack.c.b16 %v1293, %v1287
        %v1714 = vpack.c.b16 %v1294, %v1288
        %v1715 = vpack.c.b16 %v1301, %v1295
        %v1716 = vpack.c.b16 %v1302, %v1296
        %v1717 = vpack.c.b16 %v1303, %v1297
        %v1718 = vpack.c.b16 %v1304, %v1298
        %v1719 = vpack.c.b16 %v1305, %v1299
        %v1720 = vpack.c.b16 %v1306, %v1300
        %v1721 = vpack.c.b16 %v1313, %v1307
        %v1722 = vpack.c.b16 %v1314, %v1308
        %v1723 = vpack.c.b16 %v1315, %v1309
        %v1724 = vpack.c.b16 %v1316, %v1310
        %v1725 = vpack.c.b16 %v1317, %v1311
        %v1726 = vpack.c.b16 %v1318, %v1312
        %v1727 = vpack.c.b16 %v1325, %v1319
        %v1728 = vpack.c.b16 %v1326, %v1320
        %v1729 = vpack.c.b16 %v1327, %v1321
        %v1730 = vpack.c.b16 %v1328, %v1322
        %v1731 = vpack.c.b16 %v1329, %v1323
        %v1732 = vpack.c.b16 %v1330, %v1324
        %v1733 = vpack.c.b16 %v1337, %v1331
        %v1734 = vpack.c.b16 %v1338, %v1332
        %v1735 = vpack.c.b16 %v1339, %v1333
        %v1736 = vpack.c.b16 %v1340, %v1334
        %v1737 = vpack.c.b16 %v1341, %v1335
        %v1738 = vpack.c.b16 %v1342, %v1336
        %v1739 = vpack.c.b16 %v1349, %v1343
        %v1740 = vpack.c.b16 %v1350, %v1344
        %v1741 = vpack.c.b16 %v1351, %v1345
        %v1742 = vpack.c.b16 %v1352, %v1346
        %v1743 = vpack.c.b16 %v1353, %v1347
        %v1744 = vpack.c.b16 %v1354, %v1348
        %v1745 = vpack.c.b16 %v1361, %v1355
        %v1746 = vpack.c.b16 %v1362, %v1356
        %v1747 = vpack.c.b16 %v1363, %v1357
        %v1748 = vpack.c.b16 %v1364, %v1358
        %v1749 = vpack.c.b16 %v1365, %v1359
        %v1750 = vpack.c.b16 %v1366, %v1360
        %v1751 = vpack.c.b16 %v1373, %v1367
        %v1752 = vpack.c.b16 %v1374, %v1368
        %v1753 = vpack.c.b16 %v1375, %v1369
        %v1754 = vpack.c.b16 %v1376, %v1370
        %v1755 = vpack.c.b16 %v1377, %v1371
        %v1756 = vpack.c.b16 %v1378, %v1372
        %v1757 = vpack.c.b16 %v1385, %v1379
        %v1758 = vpack.c.b16 %v1386, %v1380
        %v1759 = vpack.c.b16 %v1387, %v1381
        %v1760 = vpack.c.b16 %v1388, %v1382
        %v1761 = vpack.c.b16 %v1389, %v1383
        %v1762 = vpack.c.b16 %v1390, %v1384
        %v1763 = vpack.c.b16 %v1397, %v1391
        %v1764 = vpack.c.b16 %v1398, %v1392
        %v1765 = vpack.c.b16 %v1399, %v1393
        %v1766 = vpack.c.b16 %v1400, %v1394
        %v1767 = vpack.c.b16 %v1401, %v1395
        %v1768 = vpack.c.b16 %v1402, %v1396
        %v1769 = vpack.c.b16 %v1409, %v1403
        %v1770 = vpack.c.b16 %v1410, %v1404
        %v1771 = vpack.c.b16 %v1411, %v1405
        %v1772 = vpack.c.b16 %v1412, %v1406
        %v1773 = vpack.c.b16 %v1413, %v1407
        %v1774 = vpack.c.b16 %v1414, %v1408
        %v1775 = vpack.c.b16 %v1421, %v1415
        %v1776 = vpack.c.b16 %v1422, %v1416
        %v1777 = vpack.c.b16 %v1423, %v1417
        %v1778 = vpack.c.b16 %v1424, %v1418
        %v1779 = vpack.c.b16 %v1425, %v1419
        %v1780 = vpack.c.b16 %v1426, %v1420
        %v1781 = vpack.c.b16 %v1433, %v1427
        %v1782 = vpack.c.b16 %v1434, %v1428
        %v1783 = vpack.c.b16 %v1435, %v1429
        %v1784 = vpack.c.b16 %v1436, %v1430
        %v1785 = vpack.c.b16 %v1437, %v1431
        %v1786 = vpack.c.b16 %v1438, %v1432
        %v1787 = vpack.c.b16 %v1445, %v1439
        %v1788 = vpack.c.b16 %v1446, %v1440
        %v1789 = vpack.c.b16 %v1447, %v1441
        %v1790 = vpack.c.b16 %v1448, %v1442
        %v1791 = vpack.c.b16 %v1449, %v1443
        %v1792 = vpack.c.b16 %v1450, %v1444
        %v1793 = vpack.c.b16 %v1457, %v1451
        %v1794 = vpack.c.b16 %v1458, %v1452
        %v1795 = vpack.c.b16 %v1459, %v1453
        %v1796 = vpack.c.b16 %v1460, %v1454
        %v1797 = vpack.c.b16 %v1461, %v1455
        %v1798 = vpack.c.b16 %v1462, %v1456
        %v1799 = vpack.c.b16 %v1469, %v1463
        %v1800 = vpack.c.b16 %v1470, %v1464
        %v1801 = vpack.c.b16 %v1471, %v1465
        %v1802 = vpack.c.b16 %v1472, %v1466
        %v1803 = vpack.c.b16 %v1473, %v1467
        %v1804 = vpack.c.b16 %v1474, %v1468
        %v1805 = vpack.c.b16 %v1481, %v1475
        %v1806 = vpack.c.b16 %v1482, %v1476
        %v1807 = vpack.c.b16 %v1483, %v1477
        %v1808 = vpack.c.b16 %v1484, %v1478
        %v1809 = vpack.c.b16 %v1485, %v1479
        %v1810 = vpack.c.b16 %v1486, %v1480
        %v1811 = vpack.c.b16 %v1493, %v1487
        %v1812 = vpack.c.b16 %v1494, %v1488
        %v1813 = vpack.c.b16 %v1495, %v1489
        %v1814 = vpack.c.b16 %v1496, %v1490
        %v1815 = vpack.c.b16 %v1497, %v1491
        %v1816 = vpack.c.b16 %v1498, %v1492
        %v1817 = vpack.c.b16 %v1505, %v1499
        %v1818 = vpack.c.b16 %v1506, %v1500
        %v1819 = vpack.c.b16 %v1507, %v1501
        %v1820 = vpack.c.b16 %v1508, %v1502
        %v1821 = vpack.c.b16 %v1509, %v1503
        %v1822 = vpack.c.b16 %v1510, %v1504
        %v1823 = vpack.c.b16 %v1517, %v1511
        %v1824 = vpack.c.b16 %v1518, %v1512
        %v1825 = vpack.c.b16 %v1519, %v1513
        %v1826 = vpack.c.b16 %v1520, %v1514
        %v1827 = vpack.c.b16 %v1521, %v1515
        %v1828 = vpack.c.b16 %v1522, %v1516
        %v1829 = vpack.c.b16 %v1529, %v1523
        %v1830 = vpack.c.b16 %v1530, %v1524
        %v1831 = vpack.c.b16 %v1531, %v1525
        %v1832 = vpack.c.b16 %v1532, %v1526
        %v1833 = vpack.c.b16 %v1533, %v1527
        %v1834 = vpack.c.b16 %v1534, %v1528
        %v1835 = vpack.c.b16 %v1541, %v1535
        %v1836 = vpack.c.b16 %v1542, %v1536
        %v1837 = vpack.c.b16 %v1543, %v1537
        %v1838 = vpack.c.b16 %v1544, %v1538
        %v1839 = vpack.c.b16 %v1545, %v1539
        %v1840 = vpack.c.b16 %v1546, %v1540
        %v1841 = vpack.c.b16 %v1553, %v1547
        %v1842 = vpack.c.b16 %v1554, %v1548
        %v1843 = vpack.c.b16 %v1555, %v1549
        %v1844 = vpack.c.b16 %v1556, %v1550
        %v1845 = vpack.c.b16 %v1557, %v1551
        %v1846 = vpack.c.b16 %v1558, %v1552
        %2135 = vmatpush.bf16.msra.mxu0 %v1601
        %2136 = vmatpush.bf16.msra.mxu0 %v1595
        %2137 = vmatpush.bf16.msra.mxu0 %v1589
        %2138 = vmatpush.bf16.msra.mxu0 %v1583
        %2139 = vmatpush.bf16.msra.mxu0 %v1577
        %2140 = vmatpush.bf16.msra.mxu0 %v1571
        %2141 = vmatpush.bf16.msra.mxu0 %v1565
        %2142 = vmatpush.bf16.msra.mxu0 %v1559
        %2143 = vmatmul.bf16.gmra.mxu0 %v683
        %v2144 = vpop.f32.mrf.mxu0
        %v2145 = vadd.f32 %v662, %v2144
        %v2146 = vpop.f32.mrf.mxu0
        %2147 = vdwg.mxu0
        %2148 = vmatpush.bf16.msra.mxu0 %v1649
        %2149 = vmatpush.bf16.msra.mxu0 %v1643
        %2150 = vmatpush.bf16.msra.mxu0 %v1637
        %2151 = vmatpush.bf16.msra.mxu0 %v1631
        %2152 = vmatpush.bf16.msra.mxu0 %v1625
        %2153 = vmatpush.bf16.msra.mxu0 %v1619
        %2154 = vmatpush.bf16.msra.mxu0 %v1613
        %2155 = vmatpush.bf16.msra.mxu0 %v1607
        %2156 = vmatmul.bf16.gmra.mxu0 %v684
        %v2157 = vpop.f32.mrf.mxu0
        %v2158 = vadd.f32 %v2145, %v2157
        %v2159 = vpop.f32.mrf.mxu0
        %2160 = vdwg.mxu0
        %2161 = vmatpush.bf16.msra.mxu0 %v1697
        %2162 = vmatpush.bf16.msra.mxu0 %v1691
        %2163 = vmatpush.bf16.msra.mxu0 %v1685
        %2164 = vmatpush.bf16.msra.mxu0 %v1679
        %2165 = vmatpush.bf16.msra.mxu0 %v1673
        %2166 = vmatpush.bf16.msra.mxu0 %v1667
        %2167 = vmatpush.bf16.msra.mxu0 %v1661
        %2168 = vmatpush.bf16.msra.mxu0 %v1655
        %2169 = vmatmul.bf16.gmra.mxu0 %v685
        %v2170 = vpop.f32.mrf.mxu0
        %v2171 = vadd.f32 %v2158, %v2170
        %v2172 = vpop.f32.mrf.mxu0
        %2173 = vdwg.mxu0
        %2174 = vmatpush.bf16.msra.mxu0 %v1745
        %2175 = vmatpush.bf16.msra.mxu0 %v1739
        %2176 = vmatpush.bf16.msra.mxu0 %v1733
        %2177 = vmatpush.bf16.msra.mxu0 %v1727
        %2178 = vmatpush.bf16.msra.mxu0 %v1721
        %2179 = vmatpush.bf16.msra.mxu0 %v1715
        %2180 = vmatpush.bf16.msra.mxu0 %v1709
        %2181 = vmatpush.bf16.msra.mxu0 %v1703
        %2182 = vmatmul.bf16.gmra.mxu0 %v686
        %v2183 = vpop.f32.mrf.mxu0
        %v2184 = vadd.f32 %v2171, %v2183
        %v2185 = vpop.f32.mrf.mxu0
        %2186 = vdwg.mxu0
        %2187 = vmatpush.bf16.msra.mxu0 %v1793
        %2188 = vmatpush.bf16.msra.mxu0 %v1787
        %2189 = vmatpush.bf16.msra.mxu0 %v1781
        %2190 = vmatpush.bf16.msra.mxu0 %v1775
        %2191 = vmatpush.bf16.msra.mxu0 %v1769
        %2192 = vmatpush.bf16.msra.mxu0 %v1763
        %2193 = vmatpush.bf16.msra.mxu0 %v1757
        %2194 = vmatpush.bf16.msra.mxu0 %v1751
        %2195 = vmatmul.bf16.gmra.mxu0 %v687
        %v2196 = vpop.f32.mrf.mxu0
        %v2197 = vadd.f32 %v2184, %v2196
        %v2198 = vpop.f32.mrf.mxu0
        %2199 = vdwg.mxu0
        %2200 = vmatpush.bf16.msra.mxu0 %v1841
        %2201 = vmatpush.bf16.msra.mxu0 %v1835
        %2202 = vmatpush.bf16.msra.mxu0 %v1829
        %2203 = vmatpush.bf16.msra.mxu0 %v1823
        %2204 = vmatpush.bf16.msra.mxu0 %v1817
        %2205 = vmatpush.bf16.msra.mxu0 %v1811
        %2206 = vmatpush.bf16.msra.mxu0 %v1805
        %2207 = vmatpush.bf16.msra.mxu0 %v1799
        %2208 = vmatmul.bf16.gmra.mxu0 %v688
        %v2209 = vpop.f32.mrf.mxu0
        %v2210 = vadd.f32 %v2197, %v2209
        %v2211 = vpop.f32.mrf.mxu0
        %2212 = vdwg.mxu0
        %2213 = vmatpush.bf16.msra.mxu0 %v1602
        %2214 = vmatpush.bf16.msra.mxu0 %v1596
        %2215 = vmatpush.bf16.msra.mxu0 %v1590
        %2216 = vmatpush.bf16.msra.mxu0 %v1584
        %2217 = vmatpush.bf16.msra.mxu0 %v1578
        %2218 = vmatpush.bf16.msra.mxu0 %v1572
        %2219 = vmatpush.bf16.msra.mxu0 %v1566
        %2220 = vmatpush.bf16.msra.mxu0 %v1560
        %2221 = vmatmul.bf16.gmra.mxu0 %v683
        %v2222 = vpop.f32.mrf.mxu0
        %v2223 = vadd.f32 %v663, %v2222
        %v2224 = vpop.f32.mrf.mxu0
        %2225 = vdwg.mxu0
        %2226 = vmatpush.bf16.msra.mxu0 %v1650
        %2227 = vmatpush.bf16.msra.mxu0 %v1644
        %2228 = vmatpush.bf16.msra.mxu0 %v1638
        %2229 = vmatpush.bf16.msra.mxu0 %v1632
        %2230 = vmatpush.bf16.msra.mxu0 %v1626
        %2231 = vmatpush.bf16.msra.mxu0 %v1620
        %2232 = vmatpush.bf16.msra.mxu0 %v1614
        %2233 = vmatpush.bf16.msra.mxu0 %v1608
        %2234 = vmatmul.bf16.gmra.mxu0 %v684
        %v2235 = vpop.f32.mrf.mxu0
        %v2236 = vadd.f32 %v2223, %v2235
        %v2237 = vpop.f32.mrf.mxu0
        %2238 = vdwg.mxu0
        %2239 = vmatpush.bf16.msra.mxu0 %v1698
        %2240 = vmatpush.bf16.msra.mxu0 %v1692
        %2241 = vmatpush.bf16.msra.mxu0 %v1686
        %2242 = vmatpush.bf16.msra.mxu0 %v1680
        %2243 = vmatpush.bf16.msra.mxu0 %v1674
        %2244 = vmatpush.bf16.msra.mxu0 %v1668
        %2245 = vmatpush.bf16.msra.mxu0 %v1662
        %2246 = vmatpush.bf16.msra.mxu0 %v1656
        %2247 = vmatmul.bf16.gmra.mxu0 %v685
        %v2248 = vpop.f32.mrf.mxu0
        %v2249 = vadd.f32 %v2236, %v2248
        %v2250 = vpop.f32.mrf.mxu0
        %2251 = vdwg.mxu0
        %2252 = vmatpush.bf16.msra.mxu0 %v1746
        %2253 = vmatpush.bf16.msra.mxu0 %v1740
        %2254 = vmatpush.bf16.msra.mxu0 %v1734
        %2255 = vmatpush.bf16.msra.mxu0 %v1728
        %2256 = vmatpush.bf16.msra.mxu0 %v1722
        %2257 = vmatpush.bf16.msra.mxu0 %v1716
        %2258 = vmatpush.bf16.msra.mxu0 %v1710
        %2259 = vmatpush.bf16.msra.mxu0 %v1704
        %2260 = vmatmul.bf16.gmra.mxu0 %v686
        %v2261 = vpop.f32.mrf.mxu0
        %v2262 = vadd.f32 %v2249, %v2261
        %v2263 = vpop.f32.mrf.mxu0
        %2264 = vdwg.mxu0
        %2265 = vmatpush.bf16.msra.mxu0 %v1794
        %2266 = vmatpush.bf16.msra.mxu0 %v1788
        %2267 = vmatpush.bf16.msra.mxu0 %v1782
        %2268 = vmatpush.bf16.msra.mxu0 %v1776
        %2269 = vmatpush.bf16.msra.mxu0 %v1770
        %2270 = vmatpush.bf16.msra.mxu0 %v1764
        %2271 = vmatpush.bf16.msra.mxu0 %v1758
        %2272 = vmatpush.bf16.msra.mxu0 %v1752
        %2273 = vmatmul.bf16.gmra.mxu0 %v687
        %v2274 = vpop.f32.mrf.mxu0
        %v2275 = vadd.f32 %v2262, %v2274
        %v2276 = vpop.f32.mrf.mxu0
        %2277 = vdwg.mxu0
        %2278 = vmatpush.bf16.msra.mxu0 %v1842
        %2279 = vmatpush.bf16.msra.mxu0 %v1836
        %2280 = vmatpush.bf16.msra.mxu0 %v1830
        %2281 = vmatpush.bf16.msra.mxu0 %v1824
        %2282 = vmatpush.bf16.msra.mxu0 %v1818
        %2283 = vmatpush.bf16.msra.mxu0 %v1812
        %2284 = vmatpush.bf16.msra.mxu0 %v1806
        %2285 = vmatpush.bf16.msra.mxu0 %v1800
        %2286 = vmatmul.bf16.gmra.mxu0 %v688
        %v2287 = vpop.f32.mrf.mxu0
        %v2288 = vadd.f32 %v2275, %v2287
        %v2289 = vpop.f32.mrf.mxu0
        %2290 = vdwg.mxu0
        %2291 = vmatpush.bf16.msra.mxu0 %v1603
        %2292 = vmatpush.bf16.msra.mxu0 %v1597
        %2293 = vmatpush.bf16.msra.mxu0 %v1591
        %2294 = vmatpush.bf16.msra.mxu0 %v1585
        %2295 = vmatpush.bf16.msra.mxu0 %v1579
        %2296 = vmatpush.bf16.msra.mxu0 %v1573
        %2297 = vmatpush.bf16.msra.mxu0 %v1567
        %2298 = vmatpush.bf16.msra.mxu0 %v1561
        %2299 = vmatmul.bf16.gmra.mxu0 %v683
        %v2300 = vpop.f32.mrf.mxu0
        %v2301 = vadd.f32 %v664, %v2300
        %v2302 = vpop.f32.mrf.mxu0
        %2303 = vdwg.mxu0
        %2304 = vmatpush.bf16.msra.mxu0 %v1651
        %2305 = vmatpush.bf16.msra.mxu0 %v1645
        %2306 = vmatpush.bf16.msra.mxu0 %v1639
        %2307 = vmatpush.bf16.msra.mxu0 %v1633
        %2308 = vmatpush.bf16.msra.mxu0 %v1627
        %2309 = vmatpush.bf16.msra.mxu0 %v1621
        %2310 = vmatpush.bf16.msra.mxu0 %v1615
        %2311 = vmatpush.bf16.msra.mxu0 %v1609
        %2312 = vmatmul.bf16.gmra.mxu0 %v684
        %v2313 = vpop.f32.mrf.mxu0
        %v2314 = vadd.f32 %v2301, %v2313
        %v2315 = vpop.f32.mrf.mxu0
        %2316 = vdwg.mxu0
        %2317 = vmatpush.bf16.msra.mxu0 %v1699
        %2318 = vmatpush.bf16.msra.mxu0 %v1693
        %2319 = vmatpush.bf16.msra.mxu0 %v1687
        %2320 = vmatpush.bf16.msra.mxu0 %v1681
        %2321 = vmatpush.bf16.msra.mxu0 %v1675
        %2322 = vmatpush.bf16.msra.mxu0 %v1669
        %2323 = vmatpush.bf16.msra.mxu0 %v1663
        %2324 = vmatpush.bf16.msra.mxu0 %v1657
        %2325 = vmatmul.bf16.gmra.mxu0 %v685
        %v2326 = vpop.f32.mrf.mxu0
        %v2327 = vadd.f32 %v2314, %v2326
        %v2328 = vpop.f32.mrf.mxu0
        %2329 = vdwg.mxu0
        %2330 = vmatpush.bf16.msra.mxu0 %v1747
        %2331 = vmatpush.bf16.msra.mxu0 %v1741
        %2332 = vmatpush.bf16.msra.mxu0 %v1735
        %2333 = vmatpush.bf16.msra.mxu0 %v1729
        %2334 = vmatpush.bf16.msra.mxu0 %v1723
        %2335 = vmatpush.bf16.msra.mxu0 %v1717
        %2336 = vmatpush.bf16.msra.mxu0 %v1711
        %2337 = vmatpush.bf16.msra.mxu0 %v1705
        %2338 = vmatmul.bf16.gmra.mxu0 %v686
        %v2339 = vpop.f32.mrf.mxu0
        %v2340 = vadd.f32 %v2327, %v2339
        %v2341 = vpop.f32.mrf.mxu0
        %2342 = vdwg.mxu0
        %2343 = vmatpush.bf16.msra.mxu0 %v1795
        %2344 = vmatpush.bf16.msra.mxu0 %v1789
        %2345 = vmatpush.bf16.msra.mxu0 %v1783
        %2346 = vmatpush.bf16.msra.mxu0 %v1777
        %2347 = vmatpush.bf16.msra.mxu0 %v1771
        %2348 = vmatpush.bf16.msra.mxu0 %v1765
        %2349 = vmatpush.bf16.msra.mxu0 %v1759
        %2350 = vmatpush.bf16.msra.mxu0 %v1753
        %2351 = vmatmul.bf16.gmra.mxu0 %v687
        %v2352 = vpop.f32.mrf.mxu0
        %v2353 = vadd.f32 %v2340, %v2352
        %v2354 = vpop.f32.mrf.mxu0
        %2355 = vdwg.mxu0
        %2356 = vmatpush.bf16.msra.mxu0 %v1843
        %2357 = vmatpush.bf16.msra.mxu0 %v1837
        %2358 = vmatpush.bf16.msra.mxu0 %v1831
        %2359 = vmatpush.bf16.msra.mxu0 %v1825
        %2360 = vmatpush.bf16.msra.mxu0 %v1819
        %2361 = vmatpush.bf16.msra.mxu0 %v1813
        %2362 = vmatpush.bf16.msra.mxu0 %v1807
        %2363 = vmatpush.bf16.msra.mxu0 %v1801
        %2364 = vmatmul.bf16.gmra.mxu0 %v688
        %v2365 = vpop.f32.mrf.mxu0
        %v2366 = vadd.f32 %v2353, %v2365
        %v2367 = vpop.f32.mrf.mxu0
        %2368 = vdwg.mxu0
        %2369 = vmatpush.bf16.msra.mxu0 %v1604
        %2370 = vmatpush.bf16.msra.mxu0 %v1598
        %2371 = vmatpush.bf16.msra.mxu0 %v1592
        %2372 = vmatpush.bf16.msra.mxu0 %v1586
        %2373 = vmatpush.bf16.msra.mxu0 %v1580
        %2374 = vmatpush.bf16.msra.mxu0 %v1574
        %2375 = vmatpush.bf16.msra.mxu0 %v1568
        %2376 = vmatpush.bf16.msra.mxu0 %v1562
        %2377 = vmatmul.bf16.gmra.mxu0 %v683
        %v2378 = vpop.f32.mrf.mxu0
        %v2379 = vadd.f32 %v665, %v2378
        %v2380 = vpop.f32.mrf.mxu0
        %2381 = vdwg.mxu0
        %2382 = vmatpush.bf16.msra.mxu0 %v1652
        %2383 = vmatpush.bf16.msra.mxu0 %v1646
        %2384 = vmatpush.bf16.msra.mxu0 %v1640
        %2385 = vmatpush.bf16.msra.mxu0 %v1634
        %2386 = vmatpush.bf16.msra.mxu0 %v1628
        %2387 = vmatpush.bf16.msra.mxu0 %v1622
        %2388 = vmatpush.bf16.msra.mxu0 %v1616
        %2389 = vmatpush.bf16.msra.mxu0 %v1610
        %2390 = vmatmul.bf16.gmra.mxu0 %v684
        %v2391 = vpop.f32.mrf.mxu0
        %v2392 = vadd.f32 %v2379, %v2391
        %v2393 = vpop.f32.mrf.mxu0
        %2394 = vdwg.mxu0
        %2395 = vmatpush.bf16.msra.mxu0 %v1700
        %2396 = vmatpush.bf16.msra.mxu0 %v1694
        %2397 = vmatpush.bf16.msra.mxu0 %v1688
        %2398 = vmatpush.bf16.msra.mxu0 %v1682
        %2399 = vmatpush.bf16.msra.mxu0 %v1676
        %2400 = vmatpush.bf16.msra.mxu0 %v1670
        %2401 = vmatpush.bf16.msra.mxu0 %v1664
        %2402 = vmatpush.bf16.msra.mxu0 %v1658
        %2403 = vmatmul.bf16.gmra.mxu0 %v685
        %v2404 = vpop.f32.mrf.mxu0
        %v2405 = vadd.f32 %v2392, %v2404
        %v2406 = vpop.f32.mrf.mxu0
        %2407 = vdwg.mxu0
        %2408 = vmatpush.bf16.msra.mxu0 %v1748
        %2409 = vmatpush.bf16.msra.mxu0 %v1742
        %2410 = vmatpush.bf16.msra.mxu0 %v1736
        %2411 = vmatpush.bf16.msra.mxu0 %v1730
        %2412 = vmatpush.bf16.msra.mxu0 %v1724
        %2413 = vmatpush.bf16.msra.mxu0 %v1718
        %2414 = vmatpush.bf16.msra.mxu0 %v1712
        %2415 = vmatpush.bf16.msra.mxu0 %v1706
        %2416 = vmatmul.bf16.gmra.mxu0 %v686
        %v2417 = vpop.f32.mrf.mxu0
        %v2418 = vadd.f32 %v2405, %v2417
        %v2419 = vpop.f32.mrf.mxu0
        %2420 = vdwg.mxu0
        %2421 = vmatpush.bf16.msra.mxu0 %v1796
        %2422 = vmatpush.bf16.msra.mxu0 %v1790
        %2423 = vmatpush.bf16.msra.mxu0 %v1784
        %2424 = vmatpush.bf16.msra.mxu0 %v1778
        %2425 = vmatpush.bf16.msra.mxu0 %v1772
        %2426 = vmatpush.bf16.msra.mxu0 %v1766
        %2427 = vmatpush.bf16.msra.mxu0 %v1760
        %2428 = vmatpush.bf16.msra.mxu0 %v1754
        %2429 = vmatmul.bf16.gmra.mxu0 %v687
        %v2430 = vpop.f32.mrf.mxu0
        %v2431 = vadd.f32 %v2418, %v2430
        %v2432 = vpop.f32.mrf.mxu0
        %2433 = vdwg.mxu0
        %2434 = vmatpush.bf16.msra.mxu0 %v1844
        %2435 = vmatpush.bf16.msra.mxu0 %v1838
        %2436 = vmatpush.bf16.msra.mxu0 %v1832
        %2437 = vmatpush.bf16.msra.mxu0 %v1826
        %2438 = vmatpush.bf16.msra.mxu0 %v1820
        %2439 = vmatpush.bf16.msra.mxu0 %v1814
        %2440 = vmatpush.bf16.msra.mxu0 %v1808
        %2441 = vmatpush.bf16.msra.mxu0 %v1802
        %2442 = vmatmul.bf16.gmra.mxu0 %v688
        %v2443 = vpop.f32.mrf.mxu0
        %v2444 = vadd.f32 %v2431, %v2443
        %v2445 = vpop.f32.mrf.mxu0
        %2446 = vdwg.mxu0
        %2447 = vmatpush.bf16.msra.mxu0 %v1605
        %2448 = vmatpush.bf16.msra.mxu0 %v1599
        %2449 = vmatpush.bf16.msra.mxu0 %v1593
        %2450 = vmatpush.bf16.msra.mxu0 %v1587
        %2451 = vmatpush.bf16.msra.mxu0 %v1581
        %2452 = vmatpush.bf16.msra.mxu0 %v1575
        %2453 = vmatpush.bf16.msra.mxu0 %v1569
        %2454 = vmatpush.bf16.msra.mxu0 %v1563
        %2455 = vmatmul.bf16.gmra.mxu0 %v683
        %v2456 = vpop.f32.mrf.mxu0
        %v2457 = vadd.f32 %v666, %v2456
        %v2458 = vpop.f32.mrf.mxu0
        %2459 = vdwg.mxu0
        %2460 = vmatpush.bf16.msra.mxu0 %v1653
        %2461 = vmatpush.bf16.msra.mxu0 %v1647
        %2462 = vmatpush.bf16.msra.mxu0 %v1641
        %2463 = vmatpush.bf16.msra.mxu0 %v1635
        %2464 = vmatpush.bf16.msra.mxu0 %v1629
        %2465 = vmatpush.bf16.msra.mxu0 %v1623
        %2466 = vmatpush.bf16.msra.mxu0 %v1617
        %2467 = vmatpush.bf16.msra.mxu0 %v1611
        %2468 = vmatmul.bf16.gmra.mxu0 %v684
        %v2469 = vpop.f32.mrf.mxu0
        %v2470 = vadd.f32 %v2457, %v2469
        %v2471 = vpop.f32.mrf.mxu0
        %2472 = vdwg.mxu0
        %2473 = vmatpush.bf16.msra.mxu0 %v1701
        %2474 = vmatpush.bf16.msra.mxu0 %v1695
        %2475 = vmatpush.bf16.msra.mxu0 %v1689
        %2476 = vmatpush.bf16.msra.mxu0 %v1683
        %2477 = vmatpush.bf16.msra.mxu0 %v1677
        %2478 = vmatpush.bf16.msra.mxu0 %v1671
        %2479 = vmatpush.bf16.msra.mxu0 %v1665
        %2480 = vmatpush.bf16.msra.mxu0 %v1659
        %2481 = vmatmul.bf16.gmra.mxu0 %v685
        %v2482 = vpop.f32.mrf.mxu0
        %v2483 = vadd.f32 %v2470, %v2482
        %v2484 = vpop.f32.mrf.mxu0
        %2485 = vdwg.mxu0
        %2486 = vmatpush.bf16.msra.mxu0 %v1749
        %2487 = vmatpush.bf16.msra.mxu0 %v1743
        %2488 = vmatpush.bf16.msra.mxu0 %v1737
        %2489 = vmatpush.bf16.msra.mxu0 %v1731
        %2490 = vmatpush.bf16.msra.mxu0 %v1725
        %2491 = vmatpush.bf16.msra.mxu0 %v1719
        %2492 = vmatpush.bf16.msra.mxu0 %v1713
        %2493 = vmatpush.bf16.msra.mxu0 %v1707
        %2494 = vmatmul.bf16.gmra.mxu0 %v686
        %v2495 = vpop.f32.mrf.mxu0
        %v2496 = vadd.f32 %v2483, %v2495
        %v2497 = vpop.f32.mrf.mxu0
        %2498 = vdwg.mxu0
        %2499 = vmatpush.bf16.msra.mxu0 %v1797
        %2500 = vmatpush.bf16.msra.mxu0 %v1791
        %2501 = vmatpush.bf16.msra.mxu0 %v1785
        %2502 = vmatpush.bf16.msra.mxu0 %v1779
        %2503 = vmatpush.bf16.msra.mxu0 %v1773
        %2504 = vmatpush.bf16.msra.mxu0 %v1767
        %2505 = vmatpush.bf16.msra.mxu0 %v1761
        %2506 = vmatpush.bf16.msra.mxu0 %v1755
        %2507 = vmatmul.bf16.gmra.mxu0 %v687
        %v2508 = vpop.f32.mrf.mxu0
        %v2509 = vadd.f32 %v2496, %v2508
        %v2510 = vpop.f32.mrf.mxu0
        %2511 = vdwg.mxu0
        %2512 = vmatpush.bf16.msra.mxu0 %v1845
        %2513 = vmatpush.bf16.msra.mxu0 %v1839
        %2514 = vmatpush.bf16.msra.mxu0 %v1833
        %2515 = vmatpush.bf16.msra.mxu0 %v1827
        %2516 = vmatpush.bf16.msra.mxu0 %v1821
        %2517 = vmatpush.bf16.msra.mxu0 %v1815
        %2518 = vmatpush.bf16.msra.mxu0 %v1809
        %2519 = vmatpush.bf16.msra.mxu0 %v1803
        %2520 = vmatmul.bf16.gmra.mxu0 %v688
        %v2521 = vpop.f32.mrf.mxu0
        %v2522 = vadd.f32 %v2509, %v2521
        %v2523 = vpop.f32.mrf.mxu0
        %2524 = vdwg.mxu0
        %2525 = vmatpush.bf16.msra.mxu0 %v1606
        %2526 = vmatpush.bf16.msra.mxu0 %v1600
        %2527 = vmatpush.bf16.msra.mxu0 %v1594
        %2528 = vmatpush.bf16.msra.mxu0 %v1588
        %2529 = vmatpush.bf16.msra.mxu0 %v1582
        %2530 = vmatpush.bf16.msra.mxu0 %v1576
        %2531 = vmatpush.bf16.msra.mxu0 %v1570
        %2532 = vmatpush.bf16.msra.mxu0 %v1564
        %2533 = vmatmul.bf16.gmra.mxu0 %v683
        %v2534 = vpop.f32.mrf.mxu0
        %v2535 = vadd.f32 %v667, %v2534
        %v2536 = vpop.f32.mrf.mxu0
        %2537 = vdwg.mxu0
        %2538 = vmatpush.bf16.msra.mxu0 %v1654
        %2539 = vmatpush.bf16.msra.mxu0 %v1648
        %2540 = vmatpush.bf16.msra.mxu0 %v1642
        %2541 = vmatpush.bf16.msra.mxu0 %v1636
        %2542 = vmatpush.bf16.msra.mxu0 %v1630
        %2543 = vmatpush.bf16.msra.mxu0 %v1624
        %2544 = vmatpush.bf16.msra.mxu0 %v1618
        %2545 = vmatpush.bf16.msra.mxu0 %v1612
        %2546 = vmatmul.bf16.gmra.mxu0 %v684
        %v2547 = vpop.f32.mrf.mxu0
        %v2548 = vadd.f32 %v2535, %v2547
        %v2549 = vpop.f32.mrf.mxu0
        %2550 = vdwg.mxu0
        %2551 = vmatpush.bf16.msra.mxu0 %v1702
        %2552 = vmatpush.bf16.msra.mxu0 %v1696
        %2553 = vmatpush.bf16.msra.mxu0 %v1690
        %2554 = vmatpush.bf16.msra.mxu0 %v1684
        %2555 = vmatpush.bf16.msra.mxu0 %v1678
        %2556 = vmatpush.bf16.msra.mxu0 %v1672
        %2557 = vmatpush.bf16.msra.mxu0 %v1666
        %2558 = vmatpush.bf16.msra.mxu0 %v1660
        %2559 = vmatmul.bf16.gmra.mxu0 %v685
        %v2560 = vpop.f32.mrf.mxu0
        %v2561 = vadd.f32 %v2548, %v2560
        %v2562 = vpop.f32.mrf.mxu0
        %2563 = vdwg.mxu0
        %2564 = vmatpush.bf16.msra.mxu0 %v1750
        %2565 = vmatpush.bf16.msra.mxu0 %v1744
        %2566 = vmatpush.bf16.msra.mxu0 %v1738
        %2567 = vmatpush.bf16.msra.mxu0 %v1732
        %2568 = vmatpush.bf16.msra.mxu0 %v1726
        %2569 = vmatpush.bf16.msra.mxu0 %v1720
        %2570 = vmatpush.bf16.msra.mxu0 %v1714
        %2571 = vmatpush.bf16.msra.mxu0 %v1708
        %2572 = vmatmul.bf16.gmra.mxu0 %v686
        %v2573 = vpop.f32.mrf.mxu0
        %v2574 = vadd.f32 %v2561, %v2573
        %v2575 = vpop.f32.mrf.mxu0
        %2576 = vdwg.mxu0
        %2577 = vmatpush.bf16.msra.mxu0 %v1798
        %2578 = vmatpush.bf16.msra.mxu0 %v1792
        %2579 = vmatpush.bf16.msra.mxu0 %v1786
        %2580 = vmatpush.bf16.msra.mxu0 %v1780
        %2581 = vmatpush.bf16.msra.mxu0 %v1774
        %2582 = vmatpush.bf16.msra.mxu0 %v1768
        %2583 = vmatpush.bf16.msra.mxu0 %v1762
        %2584 = vmatpush.bf16.msra.mxu0 %v1756
        %2585 = vmatmul.bf16.gmra.mxu0 %v687
        %v2586 = vpop.f32.mrf.mxu0
        %v2587 = vadd.f32 %v2574, %v2586
        %v2588 = vpop.f32.mrf.mxu0
        %2589 = vdwg.mxu0
        %2590 = vmatpush.bf16.msra.mxu0 %v1846
        %2591 = vmatpush.bf16.msra.mxu0 %v1840
        %2592 = vmatpush.bf16.msra.mxu0 %v1834
        %2593 = vmatpush.bf16.msra.mxu0 %v1828
        %2594 = vmatpush.bf16.msra.mxu0 %v1822
        %2595 = vmatpush.bf16.msra.mxu0 %v1816
        %2596 = vmatpush.bf16.msra.mxu0 %v1810
        %2597 = vmatpush.bf16.msra.mxu0 %v1804
        %2598 = vmatmul.bf16.gmra.mxu0 %v688
        %v2599 = vpop.f32.mrf.mxu0
        %v2600 = vadd.f32 %v2587, %v2599
        %v2601 = vpop.f32.mrf.mxu0
        %2602 = vdwg.mxu0
        %v2603 = vmul.f32 %v2210, 0.5
        %v2604 = vmul.f32 %v2288, 0.5
        %v2605 = vmul.f32 %v2366, 0.5
        %v2606 = vmul.f32 %v2444, 0.5
        %v2607 = vmul.f32 %v2522, 0.5
        %v2608 = vmul.f32 %v2600, 0.5
        %v2609 = vmul.f32 %v2210, 0.70710677
        %v2610 = vmul.f32 %v2288, 0.70710677
        %v2611 = vmul.f32 %v2366, 0.70710677
        %v2612 = vmul.f32 %v2444, 0.70710677
        %v2613 = vmul.f32 %v2522, 0.70710677
        %v2614 = vmul.f32 %v2600, 0.70710677
        %v2615 = vmul.f32 %v2609, %v2609
        %v2616 = vmin.f32 16.0, %v2615
        %v2617 = vmul.f32 %v2616, 2.1237322e-06
        %v2618 = vadd.f32 %v2617, 0.00028619796
        %v2619 = vmul.f32 %v2616, %v2618
        %v2620 = vadd.f32 %v2619, 0.0036580483
        %v2621 = vmul.f32 %v2616, %v2620
        %v2622 = vadd.f32 %v2621, 0.05243302
        %v2623 = vmul.f32 %v2616, %v2622
        %v2624 = vadd.f32 %v2623, 0.18741608
        %v2625 = vmul.f32 %v2616, %v2624
        %v2626 = vadd.f32 %v2625, 1.1283791
        %v2627 = vmul.f32 %v2609, %v2626
        %v2628 = vmul.f32 %v2616, 3.8918573e-05
        %v2629 = vadd.f32 %v2628, 0.001143296
        %v2630 = vmul.f32 %v2616, %v2629
        %v2631 = vadd.f32 %v2630, 0.014752088
        %v2632 = vmul.f32 %v2616, %v2631
        %v2633 = vadd.f32 %v2632, 0.112945676
        %v2634 = vmul.f32 %v2616, %v2633
        %v2635 = vadd.f32 %v2634, 0.4994258
        %v2636 = vmul.f32 %v2616, %v2635
        %v2637 = vadd.f32 %v2636, 1.0
        %v2638 = vrcp.pop %v2637
        %v2639 = vmul.f32 %v2637, %v2638
        %v2640 = vsub.f32 1.0, %v2639
        %v2641 = vmul.f32 %v2638, %v2640
        %v2642 = vadd.f32 %v2638, %v2641
        %vm2643 = vweird.f32 %v2637
        %vm2644 = vweird.f32 %v2638
        %vm2645 = vmor %vm2643, %vm2644
        %v2646 = vsel %vm2645, %v2638, %v2642
        %v2647 = vand.u32 2147483647, %v2637
        %vm2648 = vcmp.eq.f32.partialorder %v2647, 8.507059e+37
        %v2649 = vand.u32 %v2637, 2147483648
        %v2650 = vor.u32 1.1754944e-38, %v2649
        %v2651 = vsel %vm2648, %v2650, %v2646
        %v2652 = vmul.f32 %v2627, %v2651
        %v2653 = vmin.f32 %v2652, 1.0
        %v2654 = vmax.f32 %v2653, -1.0
        %v2655 = vmul.f32 %v2610, %v2610
        %v2656 = vmin.f32 16.0, %v2655
        %v2657 = vmul.f32 %v2656, 2.1237322e-06
        %v2658 = vadd.f32 %v2657, 0.00028619796
        %v2659 = vmul.f32 %v2656, %v2658
        %v2660 = vadd.f32 %v2659, 0.0036580483
        %v2661 = vmul.f32 %v2656, %v2660
        %v2662 = vadd.f32 %v2661, 0.05243302
        %v2663 = vmul.f32 %v2656, %v2662
        %v2664 = vadd.f32 %v2663, 0.18741608
        %v2665 = vmul.f32 %v2656, %v2664
        %v2666 = vadd.f32 %v2665, 1.1283791
        %v2667 = vmul.f32 %v2610, %v2666
        %v2668 = vmul.f32 %v2656, 3.8918573e-05
        %v2669 = vadd.f32 %v2668, 0.001143296
        %v2670 = vmul.f32 %v2656, %v2669
        %v2671 = vadd.f32 %v2670, 0.014752088
        %v2672 = vmul.f32 %v2656, %v2671
        %v2673 = vadd.f32 %v2672, 0.112945676
        %v2674 = vmul.f32 %v2656, %v2673
        %v2675 = vadd.f32 %v2674, 0.4994258
        %v2676 = vmul.f32 %v2656, %v2675
        %v2677 = vadd.f32 %v2676, 1.0
        %v2678 = vrcp.pop %v2677
        %v2679 = vmul.f32 %v2677, %v2678
        %v2680 = vsub.f32 1.0, %v2679
        %v2681 = vmul.f32 %v2678, %v2680
        %v2682 = vadd.f32 %v2678, %v2681
        %vm2683 = vweird.f32 %v2677
        %vm2684 = vweird.f32 %v2678
        %vm2685 = vmor %vm2683, %vm2684
        %v2686 = vsel %vm2685, %v2678, %v2682
        %v2687 = vand.u32 2147483647, %v2677
        %vm2688 = vcmp.eq.f32.partialorder %v2687, 8.507059e+37
        %v2689 = vand.u32 %v2677, 2147483648
        %v2690 = vor.u32 1.1754944e-38, %v2689
        %v2691 = vsel %vm2688, %v2690, %v2686
        %v2692 = vmul.f32 %v2667, %v2691
        %v2693 = vmin.f32 %v2692, 1.0
        %v2694 = vmax.f32 %v2693, -1.0
        %v2695 = vmul.f32 %v2611, %v2611
        %v2696 = vmin.f32 16.0, %v2695
        %v2697 = vmul.f32 %v2696, 2.1237322e-06
        %v2698 = vadd.f32 %v2697, 0.00028619796
        %v2699 = vmul.f32 %v2696, %v2698
        %v2700 = vadd.f32 %v2699, 0.0036580483
        %v2701 = vmul.f32 %v2696, %v2700
        %v2702 = vadd.f32 %v2701, 0.05243302
        %v2703 = vmul.f32 %v2696, %v2702
        %v2704 = vadd.f32 %v2703, 0.18741608
        %v2705 = vmul.f32 %v2696, %v2704
        %v2706 = vadd.f32 %v2705, 1.1283791
        %v2707 = vmul.f32 %v2611, %v2706
        %v2708 = vmul.f32 %v2696, 3.8918573e-05
        %v2709 = vadd.f32 %v2708, 0.001143296
        %v2710 = vmul.f32 %v2696, %v2709
        %v2711 = vadd.f32 %v2710, 0.014752088
        %v2712 = vmul.f32 %v2696, %v2711
        %v2713 = vadd.f32 %v2712, 0.112945676
        %v2714 = vmul.f32 %v2696, %v2713
        %v2715 = vadd.f32 %v2714, 0.4994258
        %v2716 = vmul.f32 %v2696, %v2715
        %v2717 = vadd.f32 %v2716, 1.0
        %v2718 = vrcp.pop %v2717
        %v2719 = vmul.f32 %v2717, %v2718
        %v2720 = vsub.f32 1.0, %v2719
        %v2721 = vmul.f32 %v2718, %v2720
        %v2722 = vadd.f32 %v2718, %v2721
        %vm2723 = vweird.f32 %v2717
        %vm2724 = vweird.f32 %v2718
        %vm2725 = vmor %vm2723, %vm2724
        %v2726 = vsel %vm2725, %v2718, %v2722
        %v2727 = vand.u32 2147483647, %v2717
        %vm2728 = vcmp.eq.f32.partialorder %v2727, 8.507059e+37
        %v2729 = vand.u32 %v2717, 2147483648
        %v2730 = vor.u32 1.1754944e-38, %v2729
        %v2731 = vsel %vm2728, %v2730, %v2726
        %v2732 = vmul.f32 %v2707, %v2731
        %v2733 = vmin.f32 %v2732, 1.0
        %v2734 = vmax.f32 %v2733, -1.0
        %v2735 = vmul.f32 %v2612, %v2612
        %v2736 = vmin.f32 16.0, %v2735
        %v2737 = vmul.f32 %v2736, 2.1237322e-06
        %v2738 = vadd.f32 %v2737, 0.00028619796
        %v2739 = vmul.f32 %v2736, %v2738
        %v2740 = vadd.f32 %v2739, 0.0036580483
        %v2741 = vmul.f32 %v2736, %v2740
        %v2742 = vadd.f32 %v2741, 0.05243302
        %v2743 = vmul.f32 %v2736, %v2742
        %v2744 = vadd.f32 %v2743, 0.18741608
        %v2745 = vmul.f32 %v2736, %v2744
        %v2746 = vadd.f32 %v2745, 1.1283791
        %v2747 = vmul.f32 %v2612, %v2746
        %v2748 = vmul.f32 %v2736, 3.8918573e-05
        %v2749 = vadd.f32 %v2748, 0.001143296
        %v2750 = vmul.f32 %v2736, %v2749
        %v2751 = vadd.f32 %v2750, 0.014752088
        %v2752 = vmul.f32 %v2736, %v2751
        %v2753 = vadd.f32 %v2752, 0.112945676
        %v2754 = vmul.f32 %v2736, %v2753
        %v2755 = vadd.f32 %v2754, 0.4994258
        %v2756 = vmul.f32 %v2736, %v2755
        %v2757 = vadd.f32 %v2756, 1.0
        %v2758 = vrcp.pop %v2757
        %v2759 = vmul.f32 %v2757, %v2758
        %v2760 = vsub.f32 1.0, %v2759
        %v2761 = vmul.f32 %v2758, %v2760
        %v2762 = vadd.f32 %v2758, %v2761
        %vm2763 = vweird.f32 %v2757
        %vm2764 = vweird.f32 %v2758
        %vm2765 = vmor %vm2763, %vm2764
        %v2766 = vsel %vm2765, %v2758, %v2762
        %v2767 = vand.u32 2147483647, %v2757
        %vm2768 = vcmp.eq.f32.partialorder %v2767, 8.507059e+37
        %v2769 = vand.u32 %v2757, 2147483648
        %v2770 = vor.u32 1.1754944e-38, %v2769
        %v2771 = vsel %vm2768, %v2770, %v2766
        %v2772 = vmul.f32 %v2747, %v2771
        %v2773 = vmin.f32 %v2772, 1.0
        %v2774 = vmax.f32 %v2773, -1.0
        %v2775 = vmul.f32 %v2613, %v2613
        %v2776 = vmin.f32 16.0, %v2775
        %v2777 = vmul.f32 %v2776, 2.1237322e-06
        %v2778 = vadd.f32 %v2777, 0.00028619796
        %v2779 = vmul.f32 %v2776, %v2778
        %v2780 = vadd.f32 %v2779, 0.0036580483
        %v2781 = vmul.f32 %v2776, %v2780
        %v2782 = vadd.f32 %v2781, 0.05243302
        %v2783 = vmul.f32 %v2776, %v2782
        %v2784 = vadd.f32 %v2783, 0.18741608
        %v2785 = vmul.f32 %v2776, %v2784
        %v2786 = vadd.f32 %v2785, 1.1283791
        %v2787 = vmul.f32 %v2613, %v2786
        %v2788 = vmul.f32 %v2776, 3.8918573e-05
        %v2789 = vadd.f32 %v2788, 0.001143296
        %v2790 = vmul.f32 %v2776, %v2789
        %v2791 = vadd.f32 %v2790, 0.014752088
        %v2792 = vmul.f32 %v2776, %v2791
        %v2793 = vadd.f32 %v2792, 0.112945676
        %v2794 = vmul.f32 %v2776, %v2793
        %v2795 = vadd.f32 %v2794, 0.4994258
        %v2796 = vmul.f32 %v2776, %v2795
        %v2797 = vadd.f32 %v2796, 1.0
        %v2798 = vrcp.pop %v2797
        %v2799 = vmul.f32 %v2797, %v2798
        %v2800 = vsub.f32 1.0, %v2799
        %v2801 = vmul.f32 %v2798, %v2800
        %v2802 = vadd.f32 %v2798, %v2801
        %vm2803 = vweird.f32 %v2797
        %vm2804 = vweird.f32 %v2798
        %vm2805 = vmor %vm2803, %vm2804
        %v2806 = vsel %vm2805, %v2798, %v2802
        %v2807 = vand.u32 2147483647, %v2797
        %vm2808 = vcmp.eq.f32.partialorder %v2807, 8.507059e+37
        %v2809 = vand.u32 %v2797, 2147483648
        %v2810 = vor.u32 1.1754944e-38, %v2809
        %v2811 = vsel %vm2808, %v2810, %v2806
        %v2812 = vmul.f32 %v2787, %v2811
        %v2813 = vmin.f32 %v2812, 1.0
        %v2814 = vmax.f32 %v2813, -1.0
        %v2815 = vmul.f32 %v2614, %v2614
        %v2816 = vmin.f32 16.0, %v2815
        %v2817 = vmul.f32 %v2816, 2.1237322e-06
        %v2818 = vadd.f32 %v2817, 0.00028619796
        %v2819 = vmul.f32 %v2816, %v2818
        %v2820 = vadd.f32 %v2819, 0.0036580483
        %v2821 = vmul.f32 %v2816, %v2820
        %v2822 = vadd.f32 %v2821, 0.05243302
        %v2823 = vmul.f32 %v2816, %v2822
        %v2824 = vadd.f32 %v2823, 0.18741608
        %v2825 = vmul.f32 %v2816, %v2824
        %v2826 = vadd.f32 %v2825, 1.1283791
        %v2827 = vmul.f32 %v2614, %v2826
        %v2828 = vmul.f32 %v2816, 3.8918573e-05
        %v2829 = vadd.f32 %v2828, 0.001143296
        %v2830 = vmul.f32 %v2816, %v2829
        %v2831 = vadd.f32 %v2830, 0.014752088
        %v2832 = vmul.f32 %v2816, %v2831
        %v2833 = vadd.f32 %v2832, 0.112945676
        %v2834 = vmul.f32 %v2816, %v2833
        %v2835 = vadd.f32 %v2834, 0.4994258
        %v2836 = vmul.f32 %v2816, %v2835
        %v2837 = vadd.f32 %v2836, 1.0
        %v2838 = vrcp.pop %v2837
        %v2839 = vmul.f32 %v2837, %v2838
        %v2840 = vsub.f32 1.0, %v2839
        %v2841 = vmul.f32 %v2838, %v2840
        %v2842 = vadd.f32 %v2838, %v2841
        %vm2843 = vweird.f32 %v2837
        %vm2844 = vweird.f32 %v2838
        %vm2845 = vmor %vm2843, %vm2844
        %v2846 = vsel %vm2845, %v2838, %v2842
        %v2847 = vand.u32 2147483647, %v2837
        %vm2848 = vcmp.eq.f32.partialorder %v2847, 8.507059e+37
        %v2849 = vand.u32 %v2837, 2147483648
        %v2850 = vor.u32 1.1754944e-38, %v2849
        %v2851 = vsel %vm2848, %v2850, %v2846
        %v2852 = vmul.f32 %v2827, %v2851
        %v2853 = vmin.f32 %v2852, 1.0
        %v2854 = vmax.f32 %v2853, -1.0
        %v2855 = vadd.f32 %v2654, 1.0
        %v2856 = vadd.f32 %v2694, 1.0
        %v2857 = vadd.f32 %v2734, 1.0
        %v2858 = vadd.f32 %v2774, 1.0
        %v2859 = vadd.f32 %v2814, 1.0
        %v2860 = vadd.f32 %v2854, 1.0
        %v2861 = vmul.f32 %v2603, %v2855
        %v2862 = vmul.f32 %v2604, %v2856
        %v2863 = vmul.f32 %v2605, %v2857
        %v2864 = vmul.f32 %v2606, %v2858
        %v2865 = vmul.f32 %v2607, %v2859
        %v2866 = vmul.f32 %v2608, %v2860
        %v2867 = vadd.f32 %v2861, %v2862
        %v2868 = vadd.f32 %v2867, %v2863
        %v2869 = vadd.f32 %v2868, %v2864
        %v2870 = vadd.f32 %v2869, %v2865
        %v2871 = vadd.f32 %v2870, %v2866
        %2872 = vadd.xlane.f32.xlu0 %v2871
        %v2873 = vpop.xlane.xlu0 %2872
        %v2874 = vmul.f32 %v2861, %v2861
        %v2875 = vmul.f32 %v2862, %v2862
        %v2876 = vmul.f32 %v2863, %v2863
        %v2877 = vmul.f32 %v2864, %v2864
        %v2878 = vmul.f32 %v2865, %v2865
        %v2879 = vmul.f32 %v2866, %v2866
        %v2880 = vadd.f32 %v2874, %v2875
        %v2881 = vadd.f32 %v2880, %v2876
        %v2882 = vadd.f32 %v2881, %v2877
        %v2883 = vadd.f32 %v2882, %v2878
        %v2884 = vadd.f32 %v2883, %v2879
        %2885 = vadd.xlane.f32.xlu0 %v2884
        %v2886 = vpop.xlane.xlu0 %2885
        %v2887 = vmul.f32 %v2873, 0.0013020834
        %v2888 = vmul.f32 %v2886, 0.0013020834
        %v2889 = vmul.f32 %v2887, %v2887
        %v2890 = vsub.f32 %v2888, %v2889
        %v2891 = vadd.f32 %v2890, 1e-12
        %v2892 = vrsqrt.pop %v2891
        %v2893 = vmul.f32 %v2892, %v2891
        %v2894 = vmul.f32 %v2893, %v2892
        %v2895 = vmul.f32 0.5, %v2894
        %v2896 = vsub.f32 1.5, %v2895
        %v2897 = vmul.f32 %v2892, %v2896
        %vm2898 = vweird.f32 %v2891
        %vm2899 = vweird.f32 %v2892
        %vm2900 = vmor %vm2898, %vm2899
        %v2901 = vsel %vm2900, %v2892, %v2897
        %v2902 = vsub.f32 %v2861, %v2887
        %v2903 = vsub.f32 %v2862, %v2887
        %v2904 = vsub.f32 %v2863, %v2887
        %v2905 = vsub.f32 %v2864, %v2887
        %v2906 = vsub.f32 %v2865, %v2887
        %v2907 = vsub.f32 %v2866, %v2887
        %v2908 = vmul.f32 %v2902, %v2901
        %v2909 = vmul.f32 %v2903, %v2901
        %v2910 = vmul.f32 %v2904, %v2901
        %v2911 = vmul.f32 %v2905, %v2901
        %v2912 = vmul.f32 %v2906, %v2901
        %v2913 = vmul.f32 %v2907, %v2901
        %v2914 = vld [vmem:[#allocation6] sm:$0x3f]
        %v2916 = vperm.slane %v2914, 0
        %v2917 = vperm.slane %v2914, 1
        %v2918 = vperm.slane %v2914, 2
        %v2919 = vperm.slane %v2914, 3
        %v2920 = vperm.slane %v2914, 4
        %v2921 = vperm.slane %v2914, 5
        %v2928 = vmul.f32 %v2908, %v2916
        %v2929 = vmul.f32 %v2909, %v2917
        %v2930 = vmul.f32 %v2910, %v2918
        %v2931 = vmul.f32 %v2911, %v2919
        %v2932 = vmul.f32 %v2912, %v2920
        %v2933 = vmul.f32 %v2913, %v2921
        %v2934 = vld [vmem:[#allocation7] sm:$0x3f]
        %v2936 = vperm.slane %v2934, 0
        %v2937 = vperm.slane %v2934, 1
        %v2938 = vperm.slane %v2934, 2
        %v2939 = vperm.slane %v2934, 3
        %v2940 = vperm.slane %v2934, 4
        %v2941 = vperm.slane %v2934, 5
        %v2948 = vadd.f32 %v2928, %v2936
        %v2949 = vadd.f32 %v2929, %v2937
        %v2950 = vadd.f32 %v2930, %v2938
        %v2951 = vadd.f32 %v2931, %v2939
        %v2952 = vadd.f32 %v2932, %v2940
        %v2953 = vadd.f32 %v2933, %v2941
        %v2954 = vpack.c.bf16 %v2948, %v2948
        %v2955 = vpack.c.bf16 %v2949, %v2949
        %v2956 = vpack.c.bf16 %v2950, %v2950
        %v2957 = vpack.c.bf16 %v2951, %v2951
        %v2958 = vpack.c.bf16 %v2952, %v2952
        %v2959 = vpack.c.bf16 %v2953, %v2953
        %v2960 = vld [vmem:[#allocation9] sm:$0xf]
        %v2961 = vld [vmem:[#allocation9 + $0x4] sm:$0xf]
        %v2962 = vld [vmem:[#allocation9 + $0x8] sm:$0xf]
        %v2963 = vld [vmem:[#allocation9 + $0xc] sm:$0xf]
        %v2964 = vld [vmem:[#allocation9 + $0x10] sm:$0xf]
        %v2965 = vld [vmem:[#allocation9 + $0x14] sm:$0xf]
        %v2966 = vld [vmem:[#allocation9 + $0x18] sm:$0xf]
        %v2967 = vld [vmem:[#allocation9 + $0x1c] sm:$0xf]
        %v2968 = vld [vmem:[#allocation9 + $0x20] sm:$0xf]
        %v2969 = vld [vmem:[#allocation9 + $0x24] sm:$0xf]
        %v2970 = vld [vmem:[#allocation9 + $0x28] sm:$0xf]
        %v2971 = vld [vmem:[#allocation9 + $0x2c] sm:$0xf]
        %v2972 = vld [vmem:[#allocation9 + $0x30] sm:$0xf]
        %v2973 = vld [vmem:[#allocation9 + $0x34] sm:$0xf]
        %v2974 = vld [vmem:[#allocation9 + $0x38] sm:$0xf]
        %v2975 = vld [vmem:[#allocation9 + $0x3c] sm:$0xf]
        %v2976 = vld [vmem:[#allocation9 + $0x40] sm:$0xf]
        %v2977 = vld [vmem:[#allocation9 + $0x44] sm:$0xf]
        %v2978 = vld [vmem:[#allocation9 + $0x48] sm:$0xf]
        %v2979 = vld [vmem:[#allocation9 + $0x4c] sm:$0xf]
        %v2980 = vld [vmem:[#allocation9 + $0x50] sm:$0xf]
        %v2981 = vld [vmem:[#allocation9 + $0x54] sm:$0xf]
        %v2982 = vld [vmem:[#allocation9 + $0x58] sm:$0xf]
        %v2983 = vld [vmem:[#allocation9 + $0x5c] sm:$0xf]
        %v2984 = vld [vmem:[#allocation9 + $0x60] sm:$0xf]
        %v2985 = vld [vmem:[#allocation9 + $0x64] sm:$0xf]
        %v2986 = vld [vmem:[#allocation9 + $0x68] sm:$0xf]
        %v2987 = vld [vmem:[#allocation9 + $0x6c] sm:$0xf]
        %v2988 = vld [vmem:[#allocation9 + $0x70] sm:$0xf]
        %v2989 = vld [vmem:[#allocation9 + $0x74] sm:$0xf]
        %v2990 = vld [vmem:[#allocation9 + $0x78] sm:$0xf]
        %v2991 = vld [vmem:[#allocation9 + $0x7c] sm:$0xf]
        %v2992 = vld [vmem:[#allocation9 + $0x80] sm:$0xf]
        %v2993 = vld [vmem:[#allocation9 + $0x84] sm:$0xf]
        %v2994 = vld [vmem:[#allocation9 + $0x88] sm:$0xf]
        %v2995 = vld [vmem:[#allocation9 + $0x8c] sm:$0xf]
        %v2996 = vld [vmem:[#allocation9 + $0x90] sm:$0xf]
        %v2997 = vld [vmem:[#allocation9 + $0x94] sm:$0xf]
        %v2998 = vld [vmem:[#allocation9 + $0x98] sm:$0xf]
        %v2999 = vld [vmem:[#allocation9 + $0x9c] sm:$0xf]
        %v3000 = vld [vmem:[#allocation9 + $0xa0] sm:$0xf]
        %v3001 = vld [vmem:[#allocation9 + $0xa4] sm:$0xf]
        %v3002 = vld [vmem:[#allocation9 + $0xa8] sm:$0xf]
        %v3003 = vld [vmem:[#allocation9 + $0xac] sm:$0xf]
        %v3004 = vld [vmem:[#allocation9 + $0xb0] sm:$0xf]
        %v3005 = vld [vmem:[#allocation9 + $0xb4] sm:$0xf]
        %v3006 = vld [vmem:[#allocation9 + $0xb8] sm:$0xf]
        %v3007 = vld [vmem:[#allocation9 + $0xbc] sm:$0xf]
        %v3008 = vld [vmem:[#allocation9 + $0xc0] sm:$0xf]
        %v3009 = vld [vmem:[#allocation9 + $0xc4] sm:$0xf]
        %v3010 = vld [vmem:[#allocation9 + $0xc8] sm:$0xf]
        %v3011 = vld [vmem:[#allocation9 + $0xcc] sm:$0xf]
        %v3012 = vld [vmem:[#allocation9 + $0xd0] sm:$0xf]
        %v3013 = vld [vmem:[#allocation9 + $0xd4] sm:$0xf]
        %v3014 = vld [vmem:[#allocation9 + $0xd8] sm:$0xf]
        %v3015 = vld [vmem:[#allocation9 + $0xdc] sm:$0xf]
        %v3016 = vld [vmem:[#allocation9 + $0xe0] sm:$0xf]
        %v3017 = vld [vmem:[#allocation9 + $0xe4] sm:$0xf]
        %v3018 = vld [vmem:[#allocation9 + $0xe8] sm:$0xf]
        %v3019 = vld [vmem:[#allocation9 + $0xec] sm:$0xf]
        %v3020 = vld [vmem:[#allocation9 + $0xf0] sm:$0xf]
        %v3021 = vld [vmem:[#allocation9 + $0xf4] sm:$0xf]
        %v3022 = vld [vmem:[#allocation9 + $0xf8] sm:$0xf]
        %v3023 = vld [vmem:[#allocation9 + $0xfc] sm:$0xf]
        %v3024 = vld [vmem:[#allocation9 + $0x100] sm:$0xf]
        %v3025 = vld [vmem:[#allocation9 + $0x104] sm:$0xf]
        %v3026 = vld [vmem:[#allocation9 + $0x108] sm:$0xf]
        %v3027 = vld [vmem:[#allocation9 + $0x10c] sm:$0xf]
        %v3028 = vld [vmem:[#allocation9 + $0x110] sm:$0xf]
        %v3029 = vld [vmem:[#allocation9 + $0x114] sm:$0xf]
        %v3030 = vld [vmem:[#allocation9 + $0x118] sm:$0xf]
        %v3031 = vld [vmem:[#allocation9 + $0x11c] sm:$0xf]
        %v3032 = vld [vmem:[#allocation9 + $0x120] sm:$0xf]
        %v3033 = vld [vmem:[#allocation9 + $0x124] sm:$0xf]
        %v3034 = vld [vmem:[#allocation9 + $0x128] sm:$0xf]
        %v3035 = vld [vmem:[#allocation9 + $0x12c] sm:$0xf]
        %v3036 = vld [vmem:[#allocation9 + $0x130] sm:$0xf]
        %v3037 = vld [vmem:[#allocation9 + $0x134] sm:$0xf]
        %v3038 = vld [vmem:[#allocation9 + $0x138] sm:$0xf]
        %v3039 = vld [vmem:[#allocation9 + $0x13c] sm:$0xf]
        %v3040 = vld [vmem:[#allocation9 + $0x140] sm:$0xf]
        %v3041 = vld [vmem:[#allocation9 + $0x144] sm:$0xf]
        %v3042 = vld [vmem:[#allocation9 + $0x148] sm:$0xf]
        %v3043 = vld [vmem:[#allocation9 + $0x14c] sm:$0xf]
        %v3044 = vld [vmem:[#allocation9 + $0x150] sm:$0xf]
        %v3045 = vld [vmem:[#allocation9 + $0x154] sm:$0xf]
        %v3046 = vld [vmem:[#allocation9 + $0x158] sm:$0xf]
        %v3047 = vld [vmem:[#allocation9 + $0x15c] sm:$0xf]
        %v3048 = vld [vmem:[#allocation9 + $0x160] sm:$0xf]
        %v3049 = vld [vmem:[#allocation9 + $0x164] sm:$0xf]
        %v3050 = vld [vmem:[#allocation9 + $0x168] sm:$0xf]
        %v3051 = vld [vmem:[#allocation9 + $0x16c] sm:$0xf]
        %v3052 = vld [vmem:[#allocation9 + $0x170] sm:$0xf]
        %v3053 = vld [vmem:[#allocation9 + $0x174] sm:$0xf]
        %v3054 = vld [vmem:[#allocation9 + $0x178] sm:$0xf]
        %v3055 = vld [vmem:[#allocation9 + $0x17c] sm:$0xf]
        %v3056 = vld [vmem:[#allocation10] sm:$0x1]
        %v3058 = vperm.slane %v3056, 0
        %v3156 = vunpack.c.l.b16 %v2960
        %v3157 = vunpack.c.l.b16 %v2961
        %v3158 = vunpack.c.l.b16 %v2962
        %v3159 = vunpack.c.l.b16 %v2963
        %v3160 = vunpack.c.l.b16 %v2964
        %v3161 = vunpack.c.l.b16 %v2965
        %v3162 = vunpack.c.l.b16 %v2966
        %v3163 = vunpack.c.l.b16 %v2967
        %v3164 = vunpack.c.l.b16 %v2968
        %v3165 = vunpack.c.l.b16 %v2969
        %v3166 = vunpack.c.l.b16 %v2970
        %v3167 = vunpack.c.l.b16 %v2971
        %v3168 = vunpack.c.l.b16 %v2972
        %v3169 = vunpack.c.l.b16 %v2973
        %v3170 = vunpack.c.l.b16 %v2974
        %v3171 = vunpack.c.l.b16 %v2975
        %v3172 = vunpack.c.l.b16 %v2976
        %v3173 = vunpack.c.l.b16 %v2977
        %v3174 = vunpack.c.l.b16 %v2978
        %v3175 = vunpack.c.l.b16 %v2979
        %v3176 = vunpack.c.l.b16 %v2980
        %v3177 = vunpack.c.l.b16 %v2981
        %v3178 = vunpack.c.l.b16 %v2982
        %v3179 = vunpack.c.l.b16 %v2983
        %v3180 = vunpack.c.l.b16 %v2984
        %v3181 = vunpack.c.l.b16 %v2985
        %v3182 = vunpack.c.l.b16 %v2986
        %v3183 = vunpack.c.l.b16 %v2987
        %v3184 = vunpack.c.l.b16 %v2988
        %v3185 = vunpack.c.l.b16 %v2989
        %v3186 = vunpack.c.l.b16 %v2990
        %v3187 = vunpack.c.l.b16 %v2991
        %v3188 = vunpack.c.l.b16 %v2992
        %v3189 = vunpack.c.l.b16 %v2993
        %v3190 = vunpack.c.l.b16 %v2994
        %v3191 = vunpack.c.l.b16 %v2995
        %v3192 = vunpack.c.l.b16 %v2996
        %v3193 = vunpack.c.l.b16 %v2997
        %v3194 = vunpack.c.l.b16 %v2998
        %v3195 = vunpack.c.l.b16 %v2999
        %v3196 = vunpack.c.l.b16 %v3000
        %v3197 = vunpack.c.l.b16 %v3001
        %v3198 = vunpack.c.l.b16 %v3002
        %v3199 = vunpack.c.l.b16 %v3003
        %v3200 = vunpack.c.l.b16 %v3004
        %v3201 = vunpack.c.l.b16 %v3005
        %v3202 = vunpack.c.l.b16 %v3006
        %v3203 = vunpack.c.l.b16 %v3007
        %v3204 = vunpack.c.l.b16 %v3008
        %v3205 = vunpack.c.l.b16 %v3009
        %v3206 = vunpack.c.l.b16 %v3010
        %v3207 = vunpack.c.l.b16 %v3011
        %v3208 = vunpack.c.l.b16 %v3012
        %v3209 = vunpack.c.l.b16 %v3013
        %v3210 = vunpack.c.l.b16 %v3014
        %v3211 = vunpack.c.l.b16 %v3015
        %v3212 = vunpack.c.l.b16 %v3016
        %v3213 = vunpack.c.l.b16 %v3017
        %v3214 = vunpack.c.l.b16 %v3018
        %v3215 = vunpack.c.l.b16 %v3019
        %v3216 = vunpack.c.l.b16 %v3020
        %v3217 = vunpack.c.l.b16 %v3021
        %v3218 = vunpack.c.l.b16 %v3022
        %v3219 = vunpack.c.l.b16 %v3023
        %v3220 = vunpack.c.l.b16 %v3024
        %v3221 = vunpack.c.l.b16 %v3025
        %v3222 = vunpack.c.l.b16 %v3026
        %v3223 = vunpack.c.l.b16 %v3027
        %v3224 = vunpack.c.l.b16 %v3028
        %v3225 = vunpack.c.l.b16 %v3029
        %v3226 = vunpack.c.l.b16 %v3030
        %v3227 = vunpack.c.l.b16 %v3031
        %v3228 = vunpack.c.l.b16 %v3032
        %v3229 = vunpack.c.l.b16 %v3033
        %v3230 = vunpack.c.l.b16 %v3034
        %v3231 = vunpack.c.l.b16 %v3035
        %v3232 = vunpack.c.l.b16 %v3036
        %v3233 = vunpack.c.l.b16 %v3037
        %v3234 = vunpack.c.l.b16 %v3038
        %v3235 = vunpack.c.l.b16 %v3039
        %v3236 = vunpack.c.l.b16 %v3040
        %v3237 = vunpack.c.l.b16 %v3041
        %v3238 = vunpack.c.l.b16 %v3042
        %v3239 = vunpack.c.l.b16 %v3043
        %v3240 = vunpack.c.l.b16 %v3044
        %v3241 = vunpack.c.l.b16 %v3045
        %v3242 = vunpack.c.l.b16 %v3046
        %v3243 = vunpack.c.l.b16 %v3047
        %v3244 = vunpack.c.l.b16 %v3048
        %v3245 = vunpack.c.l.b16 %v3049
        %v3246 = vunpack.c.l.b16 %v3050
        %v3247 = vunpack.c.l.b16 %v3051
        %v3248 = vunpack.c.l.b16 %v3052
        %v3249 = vunpack.c.l.b16 %v3053
        %v3250 = vunpack.c.l.b16 %v3054
        %v3251 = vunpack.c.l.b16 %v3055
        %v3252 = vpack.c.b16 %v3157, %v3156
        %v3253 = vpack.c.b16 %v3159, %v3158
        %v3254 = vpack.c.b16 %v3161, %v3160
        %v3255 = vpack.c.b16 %v3163, %v3162
        %v3256 = vpack.c.b16 %v3165, %v3164
        %v3257 = vpack.c.b16 %v3167, %v3166
        %v3258 = vpack.c.b16 %v3169, %v3168
        %v3259 = vpack.c.b16 %v3171, %v3170
        %v3260 = vpack.c.b16 %v3173, %v3172
        %v3261 = vpack.c.b16 %v3175, %v3174
        %v3262 = vpack.c.b16 %v3177, %v3176
        %v3263 = vpack.c.b16 %v3179, %v3178
        %v3264 = vpack.c.b16 %v3181, %v3180
        %v3265 = vpack.c.b16 %v3183, %v3182
        %v3266 = vpack.c.b16 %v3185, %v3184
        %v3267 = vpack.c.b16 %v3187, %v3186
        %v3268 = vpack.c.b16 %v3189, %v3188
        %v3269 = vpack.c.b16 %v3191, %v3190
        %v3270 = vpack.c.b16 %v3193, %v3192
        %v3271 = vpack.c.b16 %v3195, %v3194
        %v3272 = vpack.c.b16 %v3197, %v3196
        %v3273 = vpack.c.b16 %v3199, %v3198
        %v3274 = vpack.c.b16 %v3201, %v3200
        %v3275 = vpack.c.b16 %v3203, %v3202
        %v3276 = vpack.c.b16 %v3205, %v3204
        %v3277 = vpack.c.b16 %v3207, %v3206
        %v3278 = vpack.c.b16 %v3209, %v3208
        %v3279 = vpack.c.b16 %v3211, %v3210
        %v3280 = vpack.c.b16 %v3213, %v3212
        %v3281 = vpack.c.b16 %v3215, %v3214
        %v3282 = vpack.c.b16 %v3217, %v3216
        %v3283 = vpack.c.b16 %v3219, %v3218
        %v3284 = vpack.c.b16 %v3221, %v3220
        %v3285 = vpack.c.b16 %v3223, %v3222
        %v3286 = vpack.c.b16 %v3225, %v3224
        %v3287 = vpack.c.b16 %v3227, %v3226
        %v3288 = vpack.c.b16 %v3229, %v3228
        %v3289 = vpack.c.b16 %v3231, %v3230
        %v3290 = vpack.c.b16 %v3233, %v3232
        %v3291 = vpack.c.b16 %v3235, %v3234
        %v3292 = vpack.c.b16 %v3237, %v3236
        %v3293 = vpack.c.b16 %v3239, %v3238
        %v3294 = vpack.c.b16 %v3241, %v3240
        %v3295 = vpack.c.b16 %v3243, %v3242
        %v3296 = vpack.c.b16 %v3245, %v3244
        %v3297 = vpack.c.b16 %v3247, %v3246
        %v3298 = vpack.c.b16 %v3249, %v3248
        %v3299 = vpack.c.b16 %v3251, %v3250
        %3348 = vmatpush.bf16.msra.mxu0 %v3259
        %3349 = vmatpush.bf16.msra.mxu0 %v3258
        %3350 = vmatpush.bf16.msra.mxu0 %v3257
        %3351 = vmatpush.bf16.msra.mxu0 %v3256
        %3352 = vmatpush.bf16.msra.mxu0 %v3255
        %3353 = vmatpush.bf16.msra.mxu0 %v3254
        %3354 = vmatpush.bf16.msra.mxu0 %v3253
        %3355 = vmatpush.bf16.msra.mxu0 %v3252
        %3356 = vmatmul.bf16.gmra.mxu0 %v2954
        %v3357 = vpop.f32.mrf.mxu0
        %v3358 = vadd.f32 %v3058, %v3357
        %v3359 = vpop.f32.mrf.mxu0
        %3360 = vdwg.mxu0
        %3361 = vmatpush.bf16.msra.mxu0 %v3267
        %3362 = vmatpush.bf16.msra.mxu0 %v3266
        %3363 = vmatpush.bf16.msra.mxu0 %v3265
        %3364 = vmatpush.bf16.msra.mxu0 %v3264
        %3365 = vmatpush.bf16.msra.mxu0 %v3263
        %3366 = vmatpush.bf16.msra.mxu0 %v3262
        %3367 = vmatpush.bf16.msra.mxu0 %v3261
        %3368 = vmatpush.bf16.msra.mxu0 %v3260
        %3369 = vmatmul.bf16.gmra.mxu0 %v2955
        %v3370 = vpop.f32.mrf.mxu0
        %v3371 = vadd.f32 %v3358, %v3370
        %v3372 = vpop.f32.mrf.mxu0
        %3373 = vdwg.mxu0
        %3374 = vmatpush.bf16.msra.mxu0 %v3275
        %3375 = vmatpush.bf16.msra.mxu0 %v3274
        %3376 = vmatpush.bf16.msra.mxu0 %v3273
        %3377 = vmatpush.bf16.msra.mxu0 %v3272
        %3378 = vmatpush.bf16.msra.mxu0 %v3271
        %3379 = vmatpush.bf16.msra.mxu0 %v3270
        %3380 = vmatpush.bf16.msra.mxu0 %v3269
        %3381 = vmatpush.bf16.msra.mxu0 %v3268
        %3382 = vmatmul.bf16.gmra.mxu0 %v2956
        %v3383 = vpop.f32.mrf.mxu0
        %v3384 = vadd.f32 %v3371, %v3383
        %v3385 = vpop.f32.mrf.mxu0
        %3386 = vdwg.mxu0
        %3387 = vmatpush.bf16.msra.mxu0 %v3283
        %3388 = vmatpush.bf16.msra.mxu0 %v3282
        %3389 = vmatpush.bf16.msra.mxu0 %v3281
        %3390 = vmatpush.bf16.msra.mxu0 %v3280
        %3391 = vmatpush.bf16.msra.mxu0 %v3279
        %3392 = vmatpush.bf16.msra.mxu0 %v3278
        %3393 = vmatpush.bf16.msra.mxu0 %v3277
        %3394 = vmatpush.bf16.msra.mxu0 %v3276
        %3395 = vmatmul.bf16.gmra.mxu0 %v2957
        %v3396 = vpop.f32.mrf.mxu0
        %v3397 = vadd.f32 %v3384, %v3396
        %v3398 = vpop.f32.mrf.mxu0
        %3399 = vdwg.mxu0
        %3400 = vmatpush.bf16.msra.mxu0 %v3291
        %3401 = vmatpush.bf16.msra.mxu0 %v3290
        %3402 = vmatpush.bf16.msra.mxu0 %v3289
        %3403 = vmatpush.bf16.msra.mxu0 %v3288
        %3404 = vmatpush.bf16.msra.mxu0 %v3287
        %3405 = vmatpush.bf16.msra.mxu0 %v3286
        %3406 = vmatpush.bf16.msra.mxu0 %v3285
        %3407 = vmatpush.bf16.msra.mxu0 %v3284
        %3408 = vmatmul.bf16.gmra.mxu0 %v2958
        %v3409 = vpop.f32.mrf.mxu0
        %v3410 = vadd.f32 %v3397, %v3409
        %v3411 = vpop.f32.mrf.mxu0
        %3412 = vdwg.mxu0
        %3413 = vmatpush.bf16.msra.mxu0 %v3299
        %3414 = vmatpush.bf16.msra.mxu0 %v3298
        %3415 = vmatpush.bf16.msra.mxu0 %v3297
        %3416 = vmatpush.bf16.msra.mxu0 %v3296
        %3417 = vmatpush.bf16.msra.mxu0 %v3295
        %3418 = vmatpush.bf16.msra.mxu0 %v3294
        %3419 = vmatpush.bf16.msra.mxu0 %v3293
        %3420 = vmatpush.bf16.msra.mxu0 %v3292
        %3421 = vmatmul.bf16.gmra.mxu0 %v2959
        %v3422 = vpop.f32.mrf.mxu0
        %v3423 = vadd.f32 %v3410, %v3422
        %v3424 = vpop.f32.mrf.mxu0
        %3425 = vdwg.mxu0
        %3426 = vst [vmem:[%s368] sm:$0xff] %v3423
        %p3427 = scmp.lt.s32.totalorder %s22, 1
        %s3428 = scalar_select %p3427, %s22, 1
        %s3429 = smul.addr %s3428, 8
        %s3430 = scalar_lea.vmem %s7, %s3429
        // Predicated region
        $region73: #{text_classifier_head.1} parent=47 // pred_check
          %p3431 = pneg %p192
        $region74: #{text_classifier_head.1} parent=47 // pred_check_branch
          %3433 = sbr.rel (%p3431) target = $region76
        $region75: #{text_classifier_head.1} parent=47 // pred_region
          _
        $region76: #{text_classifier_head.1} parent=47 // pred_fallthru
          _
      $region48: #{text_classifier_head.1} parent=5 // pred_fallthru
        _
      %p3434 = scmp.le.s32.totalorder 2, %s17
      // Predicated region
      $region77: #{text_classifier_head.1} parent=5 // pred_check
        %p3435 = pneg %p3434
      $region78: #{text_classifier_head.1} parent=5 // pred_check_branch
        %3437 = sbr.rel (%p3435) target = $region80
      $region79: #{text_classifier_head.1} parent=5 // pred_region
        %s3438 = ssub.s32 %s17, 2
        // Predicated region
        $region81: #{text_classifier_head.1} parent=79 // pred_check
          %p3439 = pneg %p198
        $region82: #{text_classifier_head.1} parent=79 // pred_check_branch
          %3441 = sbr.rel (%p3439) target = $region84
        $region83: #{text_classifier_head.1} parent=79 // pred_region
          %p3442 = scmp.lt.s32.totalorder %s23, 1
          %s3443 = scalar_select %p3442, %s23, 1
          %s3444 = smul.addr %s3443, 8
          %s3445 = scalar_lea.vmem %s7, %s3444
        $region84: #{text_classifier_head.1} parent=79 // pred_fallthru
          _
      $region80: #{text_classifier_head.1} parent=5 // pred_fallthru
        _
    $region6: #{text_classifier_head.1} parent=1 // loop_footer
      %s21 = sadd.s32 1, %s17
    $region7: #{text_classifier_head.1} parent=1 // loop_footer_branch
      %16 = sbr.rel target = $region3
    $region8: #{text_classifier_head.1} parent=1 // loop_exit
      _
    %3446 = vsyncpa [#allocation3], 1
    %s3447 = scalar_lea.sflag [#allocation3], 1
    %3448 = vsyncpa %s3447, 1
    %3449 = vsyncpa [#allocation5], 1
    %3450 = vsyncpa [#allocation8], 1
    %3451 = vsyncpa [#allocation11], 1

</llo_original>
